<compile_context>
chip_gen: v5e
topology: v5e:2x2
jax: 0.10.0
libtpu: 0.0.40
codegen_flags: <defaults>
</compile_context>

<pallas_src>
import functools

import jax
import jax.numpy as jnp
from jax.experimental import pallas as pl
from jax.experimental.pallas import tpu as pltpu


def _largest_divisor_leq(n, cap):
    for d in range(min(n, cap), 0, -1):
        if n % d == 0:
            return d
    return 1


def cosmos_conv_projection_3d(x, w_s, b_s, w_t, b_t, *,
                              compute_dtype=jnp.bfloat16,
                              max_frames_per_step=4):
    """Fused CosmosConvProjection3d forward.

    x   : (B, Cin, T, H, W) float32 (PyTorch NCDHW layout).
    w_s : (3, 3, Cin, Cout)  conv_s weight (kh, kw, cin, cout).
    b_s : (Cout,)            conv_s bias.
    w_t : (3, Cout, Cout)    conv_t weight (kt, cin(=cout), cout).
    b_t : (Cout,)            conv_t bias.
    Returns (B, Cout, T, H, W) float32.
    """
    B, Cin, T, H, W = x.shape
    Cout = w_s.shape[-1]
    HW = H * W
    PAD = W + 1                       # flat zero halo on each side of a frame
    cdt = compute_dtype
    Tt = _largest_divisor_leq(T, max_frames_per_step)

    # ---- wrapper-side layout plumbing (one time, outside the kernel) ----
    # Frames channels-first and flattened: lane axis = H*W (lane dense).
    xl = jnp.transpose(x, (0, 2, 1, 3, 4)).reshape(B, T, Cin, HW)

    # conv_s weights in transposed im2col layout (Cout, 9*Cin); column index
    # is (kh*3 + kw)*Cin + cin, matching the rows of the col scratch.
    ws_T = jnp.transpose(w_s.reshape(9 * Cin, Cout)).astype(cdt)

    # conv_t: pre-combine the 3 temporal taps into one (Cout, 3*Cout) matrix
    # per case so conv_t is a single matmul against the ring read in physical
    # slab order (slab s holds y[t'] with t' % 3 == s; tap k reads y[t+k-2],
    # clamped to y[0] for t<2 -> explicit zero blocks for unwritten slabs).
    wt_T = jnp.transpose(w_t, (0, 2, 1))             # wt_T[k] = w_t[k].T
    zero = jnp.zeros((Cout, Cout), w_t.dtype)
    wt_cases = jnp.stack([
        jnp.concatenate([wt_T[0] + wt_T[1] + wt_T[2], zero, zero], axis=1),  # t == 0
        jnp.concatenate([wt_T[0] + wt_T[1], wt_T[2], zero], axis=1),         # t == 1
        jnp.concatenate([wt_T[2], wt_T[0], wt_T[1]], axis=1),                # t>=2, t%3==0
        jnp.concatenate([wt_T[1], wt_T[2], wt_T[0]], axis=1),                # t>=2, t%3==1
        jnp.concatenate([wt_T[0], wt_T[1], wt_T[2]], axis=1),                # t>=2, t%3==2
    ]).astype(cdt)                                    # (5, Cout, 3*Cout)

    bs2 = b_s.reshape(Cout, 1).astype(jnp.float32)
    bt2 = b_t.reshape(Cout, 1).astype(jnp.float32)

    # Border masks for the kw = -1 / +1 taps (kh borders are absorbed by the
    # flat zero pad of width W+1 on each side).
    w_idx = jnp.arange(HW, dtype=jnp.int32) % W
    masks = jnp.stack([(w_idx >= 1), (w_idx <= W - 2)]).astype(jnp.float32)  # (2, HW)

    def kernel(x_ref, ws_ref, bs_ref, wtc_ref, bt_ref, msk_ref, o_ref,
               xpf_ref, col_ref, ring_ref):
        tblk = pl.program_id(1)

        @pl.when(tblk == 0)
        def _init():
            # Zero the flat-padded frame (halos stay zero afterwards) and the
            # ring, so no uninitialized VMEM ever reaches the MXU.
            xpf_ref[...] = jnp.zeros_like(xpf_ref)
            ring_ref[...] = jnp.zeros_like(ring_ref)

        ws_mat = ws_ref[...]
        bs_val = bs_ref[...]
        bt_val = bt_ref[...]
        m_left = msk_ref[0:1, :]
        m_right = msk_ref[1:2, :]

        for j in range(Tt):                          # static unroll over frames
            t = tblk * Tt + j

            # ---- conv_s: flat pad -> 9 contiguous lane-slice taps -> 1 matmul
            xpf_ref[:, PAD:PAD + HW] = x_ref[0, j]
            for kh in range(3):
                for kw in range(3):
                    tap = kh * 3 + kw
                    start = PAD + (kh - 1) * W + (kw - 1)
                    win = xpf_ref[:, start:start + HW]
                    if kw == 0:
                        win = win * m_left
                    elif kw == 2:
                        win = win * m_right
                    col_ref[tap * Cin:(tap + 1) * Cin, :] = win.astype(cdt)
            s = jnp.dot(ws_mat, col_ref[...],
                        preferred_element_type=jnp.float32) + bs_val
            ring_ref[pl.ds((t % 3) * Cout, Cout), :] = s.astype(cdt)

            # ---- conv_t: single K=3*Cout matmul against the ring ----
            case = jnp.where(t == 0, 0, jnp.where(t == 1, 1, 2 + t % 3))
            z = jnp.dot(wtc_ref[case], ring_ref[...],
                        preferred_element_type=jnp.float32) + bt_val
            o_ref[0, j] = z.astype(o_ref.dtype)

    # Explicit VMEM budget (double-buffered blocks + scratch + weights), with
    # generous headroom for (8,128) / (16,128) tile padding.
    est = (2 * Tt * Cin * HW * 4 + 2 * Tt * Cout * HW * 4      # in/out blocks
           + Cin * (HW + 2 * PAD) * 4                          # padded frame
           + 9 * Cin * HW * 4 + 3 * Cout * HW * 4              # col + ring
           + (Cout * 9 * Cin + 15 * Cout * Cout + 2 * Cout + 2 * HW) * 4)
    vmem_limit = int(min(100 * 1024 * 1024, max(16 * 1024 * 1024, 4 * est)))

    out = pl.pallas_call(
        kernel,
        out_shape=jax.ShapeDtypeStruct((B, T, Cout, HW), jnp.float32),
        grid=(B, T // Tt),
        in_specs=[
            pl.BlockSpec((1, Tt, Cin, HW), lambda b, tb: (b, tb, 0, 0)),
            pl.BlockSpec((Cout, 9 * Cin), lambda b, tb: (0, 0)),
            pl.BlockSpec((Cout, 1), lambda b, tb: (0, 0)),
            pl.BlockSpec((5, Cout, 3 * Cout), lambda b, tb: (0, 0, 0)),
            pl.BlockSpec((Cout, 1), lambda b, tb: (0, 0)),
            pl.BlockSpec((2, HW), lambda b, tb: (0, 0)),
        ],
        out_specs=pl.BlockSpec((1, Tt, Cout, HW), lambda b, tb: (b, tb, 0, 0)),
        scratch_shapes=[
            pltpu.VMEM((Cin, HW + 2 * PAD), jnp.float32),   # flat padded frame
            pltpu.VMEM((9 * Cin, HW), cdt),                 # transposed im2col
            pltpu.VMEM((3 * Cout, HW), cdt),                # conv_s ring buffer
        ],
        compiler_params=pltpu.CompilerParams(
            # B is independent (megacore parallel); T carries the ring buffer
            # and the padded-frame halos, so it must stay sequential.
            dimension_semantics=("parallel", "arbitrary"),
            vmem_limit_bytes=vmem_limit),
    )(xl, ws_T, bs2, wt_cases, bt2, masks)

    out = out.reshape(B, T, Cout, H, W)
    return jnp.transpose(out, (0, 2, 1, 3, 4))       # back to (B, Cout, T, H, W)


def _reference(x, w_s, b_s, w_t, b_t):
    """Pure-JAX reference mirroring the PyTorch module (NCDHW convs)."""
    ws = jnp.transpose(w_s, (3, 2, 0, 1))[:, :, None]            # (Cout, Cin, 1, 3, 3)
    wt = jnp.transpose(w_t, (2, 1, 0))[:, :, :, None, None]      # (Cout, Cout, 3, 1, 1)
    dn = ("NCDHW", "OIDHW", "NCDHW")
    hp = jax.lax.Precision.HIGHEST
    y = jax.lax.conv_general_dilated(
        x, ws, (1, 1, 1), [(0, 0), (1, 1), (1, 1)], dimension_numbers=dn,
        precision=hp)
    y = y + b_s[None, :, None, None, None]
    y_pad = jnp.concatenate([jnp.repeat(y[:, :, :1], 2, axis=2), y], axis=2)
    z = jax.lax.conv_general_dilated(
        y_pad, wt, (1, 1, 1), [(0, 0), (0, 0), (0, 0)], dimension_numbers=dn,
        precision=hp)
    return z + b_t[None, :, None, None, None]


if __name__ == "__main__":
    key = jax.random.PRNGKey(0)
    B, Cin, Cout, T, H, W = 2, 4, 16, 8, 16, 16
    k1, k2, k3, k4, k5 = jax.random.split(key, 5)

    x = jax.random.normal(k1, (B, Cin, T, H, W), jnp.float32)
    # Parameter layouts (from CosmosCausalConv3d):
    #   conv_s.weight (Cout, Cin, 1, 3, 3)  -> stored here as (3, 3, Cin, Cout)
    #   conv_t.weight (Cout, Cout, 3, 1, 1) -> stored here as (3, Cout, Cout)
    w_s = jax.random.normal(k2, (3, 3, Cin, Cout), jnp.float32) * 0.1
    b_s = jax.random.normal(k3, (Cout,), jnp.float32) * 0.1
    w_t = jax.random.normal(k4, (3, Cout, Cout), jnp.float32) * 0.1
    b_t = jax.random.normal(k5, (Cout,), jnp.float32) * 0.1

    ref = _reference(x, w_s, b_s, w_t, b_t)

    # f32 MXU operands: near-exact path (tolerance left loose enough to be
    # robust to MXU multi-pass configuration; structural errors are >> 1e-2).
    run_f32 = jax.jit(functools.partial(cosmos_conv_projection_3d,
                                        compute_dtype=jnp.float32))
    out_f32 = jax.block_until_ready(run_f32(x, w_s, b_s, w_t, b_t))
    assert out_f32.shape == (B, Cout, T, H, W), out_f32.shape
    assert jnp.allclose(out_f32, ref, atol=1e-2, rtol=1e-2), "f32 mismatch vs reference"

    # bf16 MXU operands with f32 accumulation (fast path): bf16-level tolerance.
    run_bf16 = jax.jit(functools.partial(cosmos_conv_projection_3d,
                                         compute_dtype=jnp.bfloat16))
    out_bf16 = jax.block_until_ready(run_bf16(x, w_s, b_s, w_t, b_t))
    assert out_bf16.shape == (B, Cout, T, H, W), out_bf16.shape
    assert jnp.allclose(out_bf16, ref, atol=5e-2, rtol=5e-2), "bf16 mismatch vs reference"

    print("KERNEL_OK")
</pallas_src>

<mosaic_0001>
module attributes {stable_mosaic.version = 11 : i64} {
  func.func @kernel(%arg0: i32, %arg1: i32, %arg2: memref<1x4x4x256xf32, #tpu.memory_space<vmem>>, %arg3: memref<16x36xf32, #tpu.memory_space<vmem>>, %arg4: memref<16x1xf32, #tpu.memory_space<vmem>>, %arg5: memref<5x16x48xf32, #tpu.memory_space<vmem>>, %arg6: memref<16x1xf32, #tpu.memory_space<vmem>>, %arg7: memref<2x256xf32, #tpu.memory_space<vmem>>, %arg8: memref<1x4x16x256xf32, #tpu.memory_space<vmem>>, %arg9: memref<4x290xf32, #tpu.memory_space<vmem>>, %arg10: memref<36x256xf32, #tpu.memory_space<vmem>>, %arg11: memref<48x256xf32, #tpu.memory_space<vmem>>) attributes {dimension_semantics = [#tpu.dimension_semantics<parallel>, #tpu.dimension_semantics<arbitrary>], iteration_bounds = array<i64: 2, 2>, scalar_prefetch = 0 : i64, scratch_operands = 3 : i64, tpu.core_type = #tpu.core_type<tc>, window_params = [{transform_indices = @transform_0, window_bounds = array<i64: 1, 4, 4, 256>}, {pipeline_mode = #tpu.pipeline_mode<synchronous>, transform_indices = @transform_1, window_bounds = array<i64: 16, 36>}, {pipeline_mode = #tpu.pipeline_mode<synchronous>, transform_indices = @transform_2, window_bounds = array<i64: 16, 1>}, {pipeline_mode = #tpu.pipeline_mode<synchronous>, transform_indices = @transform_3, window_bounds = array<i64: 5, 16, 48>}, {pipeline_mode = #tpu.pipeline_mode<synchronous>, transform_indices = @transform_4, window_bounds = array<i64: 16, 1>}, {pipeline_mode = #tpu.pipeline_mode<synchronous>, transform_indices = @transform_5, window_bounds = array<i64: 2, 256>}, {transform_indices = @transform_6, window_bounds = array<i64: 1, 4, 16, 256>}]} {
    %c0_i32 = arith.constant 0 : i32
    %0 = arith.cmpi eq, %arg1, %c0_i32 : i32
    %1 = arith.extui %0 : i1 to i32
    %c0_i32_0 = arith.constant 0 : i32
    %2 = arith.cmpi ne, %1, %c0_i32_0 : i32
    scf.if %2 {
      %cst_289 = arith.constant 0.000000e+00 : f32
      %316 = vector.broadcast %cst_289 : f32 to vector<4x290xf32>
      %c0_290 = arith.constant 0 : index
      %c0_291 = arith.constant 0 : index
      %317 = vector.load %arg9[%c0_290, %c0_291] : memref<4x290xf32, #tpu.memory_space<vmem>>, vector<4x290xf32>
      tpu.vector_store %arg9[%c0_290, %c0_291], %316 {strides = array<i32>} : memref<4x290xf32, #tpu.memory_space<vmem>>, vector<4x290xf32>,
      %cst_292 = arith.constant 0.000000e+00 : f32
      %318 = vector.broadcast %cst_292 : f32 to vector<48x256xf32>
      %c0_293 = arith.constant 0 : index
      %c0_294 = arith.constant 0 : index
      %319 = vector.load %arg11[%c0_293, %c0_294] : memref<48x256xf32, #tpu.memory_space<vmem>>, vector<48x256xf32>
      tpu.vector_store %arg11[%c0_293, %c0_294], %318 {strides = array<i32>} : memref<48x256xf32, #tpu.memory_space<vmem>>, vector<48x256xf32>,
    } else {
    }
    %c0 = arith.constant 0 : index
    %c0_1 = arith.constant 0 : index
    %3 = vector.load %arg3[%c0, %c0_1] : memref<16x36xf32, #tpu.memory_space<vmem>>, vector<16x36xf32>
    %c0_2 = arith.constant 0 : index
    %c0_3 = arith.constant 0 : index
    %4 = vector.load %arg4[%c0_2, %c0_3] : memref<16x1xf32, #tpu.memory_space<vmem>>, vector<16x1xf32>
    %c0_4 = arith.constant 0 : index
    %c0_5 = arith.constant 0 : index
    %5 = vector.load %arg6[%c0_4, %c0_5] : memref<16x1xf32, #tpu.memory_space<vmem>>, vector<16x1xf32>
    %c0_6 = arith.constant 0 : index
    %c0_7 = arith.constant 0 : index
    %6 = vector.load %arg7[%c0_6, %c0_7] : memref<2x256xf32, #tpu.memory_space<vmem>>, vector<1x256xf32>
    %c1 = arith.constant 1 : index
    %c0_8 = arith.constant 0 : index
    %7 = vector.load %arg7[%c1, %c0_8] : memref<2x256xf32, #tpu.memory_space<vmem>>, vector<1x256xf32>
    %c4_i32 = arith.constant 4 : i32
    %8 = arith.muli %arg1, %c4_i32 : i32
    %c0_i32_9 = arith.constant 0 : i32
    %9 = arith.addi %8, %c0_i32_9 : i32
    %c0_10 = arith.constant 0 : index
    %c0_11 = arith.constant 0 : index
    %c0_12 = arith.constant 0 : index
    %c0_13 = arith.constant 0 : index
    %10 = vector.load %arg2[%c0_10, %c0_11, %c0_12, %c0_13] : memref<1x4x4x256xf32, #tpu.memory_space<vmem>>, vector<1x1x4x256xf32>
    %11 = vector.shape_cast %10 : vector<1x1x4x256xf32> to vector<4x256xf32>
    %c0_14 = arith.constant 0 : index
    %c17 = arith.constant 17 : index
    %12 = vector.load %arg9[%c0_14, %c17] : memref<4x290xf32, #tpu.memory_space<vmem>>, vector<4x256xf32>
    tpu.vector_store %arg9[%c0_14, %c17], %11 {strides = array<i32>} : memref<4x290xf32, #tpu.memory_space<vmem>>, vector<4x256xf32>,
    %c0_15 = arith.constant 0 : index
    %c0_16 = arith.constant 0 : index
    %13 = vector.load %arg9[%c0_15, %c0_16] : memref<4x290xf32, #tpu.memory_space<vmem>>, vector<4x256xf32>
    %14 = vector.broadcast %6 : vector<1x256xf32> to vector<4x256xf32>
    %15 = arith.mulf %13, %14 : vector<4x256xf32>
    %c0_17 = arith.constant 0 : index
    %c0_18 = arith.constant 0 : index
    %16 = vector.load %arg10[%c0_17, %c0_18] : memref<36x256xf32, #tpu.memory_space<vmem>>, vector<4x256xf32>
    tpu.vector_store %arg10[%c0_17, %c0_18], %15 {strides = array<i32>} : memref<36x256xf32, #tpu.memory_space<vmem>>, vector<4x256xf32>,
    %c0_19 = arith.constant 0 : index
    %c1_20 = arith.constant 1 : index
    %17 = vector.load %arg9[%c0_19, %c1_20] : memref<4x290xf32, #tpu.memory_space<vmem>>, vector<4x256xf32>
    %c4 = arith.constant 4 : index
    %c0_21 = arith.constant 0 : index
    %18 = vector.load %arg10[%c4, %c0_21] : memref<36x256xf32, #tpu.memory_space<vmem>>, vector<4x256xf32>
    tpu.vector_store %arg10[%c4, %c0_21], %17 {strides = array<i32>} : memref<36x256xf32, #tpu.memory_space<vmem>>, vector<4x256xf32>,
    %c0_22 = arith.constant 0 : index
    %c2 = arith.constant 2 : index
    %19 = vector.load %arg9[%c0_22, %c2] : memref<4x290xf32, #tpu.memory_space<vmem>>, vector<4x256xf32>
    %20 = vector.broadcast %7 : vector<1x256xf32> to vector<4x256xf32>
    %21 = arith.mulf %19, %20 : vector<4x256xf32>
    %c8 = arith.constant 8 : index
    %c0_23 = arith.constant 0 : index
    %22 = vector.load %arg10[%c8, %c0_23] : memref<36x256xf32, #tpu.memory_space<vmem>>, vector<4x256xf32>
    tpu.vector_store %arg10[%c8, %c0_23], %21 {strides = array<i32>} : memref<36x256xf32, #tpu.memory_space<vmem>>, vector<4x256xf32>,
    %c0_24 = arith.constant 0 : index
    %c16 = arith.constant 16 : index
    %23 = vector.load %arg9[%c0_24, %c16] : memref<4x290xf32, #tpu.memory_space<vmem>>, vector<4x256xf32>
    %24 = vector.broadcast %6 : vector<1x256xf32> to vector<4x256xf32>
    %25 = arith.mulf %23, %24 : vector<4x256xf32>
    %c12 = arith.constant 12 : index
    %c0_25 = arith.constant 0 : index
    %26 = vector.load %arg10[%c12, %c0_25] : memref<36x256xf32, #tpu.memory_space<vmem>>, vector<4x256xf32>
    tpu.vector_store %arg10[%c12, %c0_25], %25 {strides = array<i32>} : memref<36x256xf32, #tpu.memory_space<vmem>>, vector<4x256xf32>,
    %c0_26 = arith.constant 0 : index
    %c17_27 = arith.constant 17 : index
    %27 = vector.load %arg9[%c0_26, %c17_27] : memref<4x290xf32, #tpu.memory_space<vmem>>, vector<4x256xf32>
    %c16_28 = arith.constant 16 : index
    %c0_29 = arith.constant 0 : index
    %28 = vector.load %arg10[%c16_28, %c0_29] : memref<36x256xf32, #tpu.memory_space<vmem>>, vector<4x256xf32>
    tpu.vector_store %arg10[%c16_28, %c0_29], %27 {strides = array<i32>} : memref<36x256xf32, #tpu.memory_space<vmem>>, vector<4x256xf32>,
    %c0_30 = arith.constant 0 : index
    %c18 = arith.constant 18 : index
    %29 = vector.load %arg9[%c0_30, %c18] : memref<4x290xf32, #tpu.memory_space<vmem>>, vector<4x256xf32>
    %30 = vector.broadcast %7 : vector<1x256xf32> to vector<4x256xf32>
    %31 = arith.mulf %29, %30 : vector<4x256xf32>
    %c20 = arith.constant 20 : index
    %c0_31 = arith.constant 0 : index
    %32 = vector.load %arg10[%c20, %c0_31] : memref<36x256xf32, #tpu.memory_space<vmem>>, vector<4x256xf32>
    tpu.vector_store %arg10[%c20, %c0_31], %31 {strides = array<i32>} : memref<36x256xf32, #tpu.memory_space<vmem>>, vector<4x256xf32>,
    %c0_32 = arith.constant 0 : index
    %c32 = arith.constant 32 : index
    %33 = vector.load %arg9[%c0_32, %c32] : memref<4x290xf32, #tpu.memory_space<vmem>>, vector<4x256xf32>
    %34 = vector.broadcast %6 : vector<1x256xf32> to vector<4x256xf32>
    %35 = arith.mulf %33, %34 : vector<4x256xf32>
    %c24 = arith.constant 24 : index
    %c0_33 = arith.constant 0 : index
    %36 = vector.load %arg10[%c24, %c0_33] : memref<36x256xf32, #tpu.memory_space<vmem>>, vector<4x256xf32>
    tpu.vector_store %arg10[%c24, %c0_33], %35 {strides = array<i32>} : memref<36x256xf32, #tpu.memory_space<vmem>>, vector<4x256xf32>,
    %c0_34 = arith.constant 0 : index
    %c33 = arith.constant 33 : index
    %37 = vector.load %arg9[%c0_34, %c33] : memref<4x290xf32, #tpu.memory_space<vmem>>, vector<4x256xf32>
    %c28 = arith.constant 28 : index
    %c0_35 = arith.constant 0 : index
    %38 = vector.load %arg10[%c28, %c0_35] : memref<36x256xf32, #tpu.memory_space<vmem>>, vector<4x256xf32>
    tpu.vector_store %arg10[%c28, %c0_35], %37 {strides = array<i32>} : memref<36x256xf32, #tpu.memory_space<vmem>>, vector<4x256xf32>,
    %c0_36 = arith.constant 0 : index
    %c34 = arith.constant 34 : index
    %39 = vector.load %arg9[%c0_36, %c34] : memref<4x290xf32, #tpu.memory_space<vmem>>, vector<4x256xf32>
    %40 = vector.broadcast %7 : vector<1x256xf32> to vector<4x256xf32>
    %41 = arith.mulf %39, %40 : vector<4x256xf32>
    %c32_37 = arith.constant 32 : index
    %c0_38 = arith.constant 0 : index
    %42 = vector.load %arg10[%c32_37, %c0_38] : memref<36x256xf32, #tpu.memory_space<vmem>>, vector<4x256xf32>
    tpu.vector_store %arg10[%c32_37, %c0_38], %41 {strides = array<i32>} : memref<36x256xf32, #tpu.memory_space<vmem>>, vector<4x256xf32>,
    %c0_39 = arith.constant 0 : index
    %c0_40 = arith.constant 0 : index
    %43 = vector.load %arg10[%c0_39, %c0_40] : memref<36x256xf32, #tpu.memory_space<vmem>>, vector<36x256xf32>
    %cst = arith.constant dense<0.000000e+00> : vector<16x256xf32>
    %44 = tpu.matmul %3, %43, %cst {dimension_numbers = #tpu.dot_dimension_numbers<[1], [0], [0], [1], [0, 0, 1, 1], [], []>} : vector<16x36xf32>, vector<36x256xf32>, vector<16x256xf32> -> vector<16x256xf32>
    %45 = vector.broadcast %4 : vector<16x1xf32> to vector<16x256xf32>
    %46 = arith.addf %44, %45 : vector<16x256xf32>
    %c3_i32 = arith.constant 3 : i32
    %c0_i32_41 = arith.constant 0 : i32
    %47 = arith.cmpi eq, %c3_i32, %c0_i32_41 : i32
    %c1_i32 = arith.constant 1 : i32
    %48 = arith.select %47, %c1_i32, %c3_i32 : i32
    %49 = arith.remsi %9, %48 : i32
    %c0_i32_42 = arith.constant 0 : i32
    %50 = arith.cmpi ne, %49, %c0_i32_42 : i32
    %c0_i32_43 = arith.constant 0 : i32
    %51 = arith.cmpi slt, %49, %c0_i32_43 : i32
    %c0_i32_44 = arith.constant 0 : i32
    %52 = arith.cmpi slt, %48, %c0_i32_44 : i32
    %53 = arith.xori %51, %52 : i1
    %54 = arith.andi %53, %50 : i1
    %55 = arith.addi %49, %48 : i32
    %56 = arith.select %54, %55, %49 : i32
    %c16_i32 = arith.constant 16 : i32
    %57 = arith.muli %56, %c16_i32 : i32
    %58 = arith.index_cast %57 : i32 to index
    %c0_45 = arith.constant 0 : index
    %59 = vector.load %arg11[%58, %c0_45] : memref<48x256xf32, #tpu.memory_space<vmem>>, vector<16x256xf32>
    tpu.vector_store %arg11[%58, %c0_45], %46 {strides = array<i32>} : memref<48x256xf32, #tpu.memory_space<vmem>>, vector<16x256xf32>,
    %c0_i32_46 = arith.constant 0 : i32
    %60 = arith.cmpi eq, %9, %c0_i32_46 : i32
    %c1_i32_47 = arith.constant 1 : i32
    %61 = arith.cmpi eq, %9, %c1_i32_47 : i32
    %c3_i32_48 = arith.constant 3 : i32
    %c0_i32_49 = arith.constant 0 : i32
    %62 = arith.cmpi eq, %c3_i32_48, %c0_i32_49 : i32
    %c1_i32_50 = arith.constant 1 : i32
    %63 = arith.select %62, %c1_i32_50, %c3_i32_48 : i32
    %64 = arith.remsi %9, %63 : i32
    %c0_i32_51 = arith.constant 0 : i32
    %65 = arith.cmpi ne, %64, %c0_i32_51 : i32
    %c0_i32_52 = arith.constant 0 : i32
    %66 = arith.cmpi slt, %64, %c0_i32_52 : i32
    %c0_i32_53 = arith.constant 0 : i32
    %67 = arith.cmpi slt, %63, %c0_i32_53 : i32
    %68 = arith.xori %66, %67 : i1
    %69 = arith.andi %68, %65 : i1
    %70 = arith.addi %64, %63 : i32
    %71 = arith.select %69, %70, %64 : i32
    %c2_i32 = arith.constant 2 : i32
    %72 = arith.addi %c2_i32, %71 : i32
    %c1_i32_54 = arith.constant 1 : i32
    %73 = arith.select %61, %c1_i32_54, %72 : i32
    %c0_i32_55 = arith.constant 0 : i32
    %74 = arith.select %60, %c0_i32_55, %73 : i32
    %75 = arith.index_cast %74 : i32 to index
    %c0_56 = arith.constant 0 : index
    %c0_57 = arith.constant 0 : index
    %76 = vector.load %arg5[%75, %c0_56, %c0_57] : memref<5x16x48xf32, #tpu.memory_space<vmem>>, vector<1x16x48xf32>
    %77 = vector.shape_cast %76 : vector<1x16x48xf32> to vector<16x48xf32>
    %c0_58 = arith.constant 0 : index
    %c0_59 = arith.constant 0 : index
    %78 = vector.load %arg11[%c0_58, %c0_59] : memref<48x256xf32, #tpu.memory_space<vmem>>, vector<48x256xf32>
    %cst_60 = arith.constant dense<0.000000e+00> : vector<16x256xf32>
    %79 = tpu.matmul %77, %78, %cst_60 {dimension_numbers = #tpu.dot_dimension_numbers<[1], [0], [0], [1], [0, 0, 1, 1], [], []>} : vector<16x48xf32>, vector<48x256xf32>, vector<16x256xf32> -> vector<16x256xf32>
    %80 = vector.broadcast %5 : vector<16x1xf32> to vector<16x256xf32>
    %81 = arith.addf %79, %80 : vector<16x256xf32>
    %c0_61 = arith.constant 0 : index
    %c0_62 = arith.constant 0 : index
    %c0_63 = arith.constant 0 : index
    %c0_64 = arith.constant 0 : index
    %82 = vector.load %arg8[%c0_61, %c0_62, %c0_63, %c0_64] : memref<1x4x16x256xf32, #tpu.memory_space<vmem>>, vector<1x1x16x256xf32>
    %83 = vector.shape_cast %82 : vector<1x1x16x256xf32> to vector<16x256xf32>
    %84 = vector.shape_cast %81 : vector<16x256xf32> to vector<1x1x16x256xf32>
    tpu.vector_store %arg8[%c0_61, %c0_62, %c0_63, %c0_64], %84 {strides = array<i32>} : memref<1x4x16x256xf32, #tpu.memory_space<vmem>>, vector<1x1x16x256xf32>,
    %c4_i32_65 = arith.constant 4 : i32
    %85 = arith.muli %arg1, %c4_i32_65 : i32
    %c1_i32_66 = arith.constant 1 : i32
    %86 = arith.addi %85, %c1_i32_66 : i32
    %c0_67 = arith.constant 0 : index
    %c1_68 = arith.constant 1 : index
    %c0_69 = arith.constant 0 : index
    %c0_70 = arith.constant 0 : index
    %87 = vector.load %arg2[%c0_67, %c1_68, %c0_69, %c0_70] : memref<1x4x4x256xf32, #tpu.memory_space<vmem>>, vector<1x1x4x256xf32>
    %88 = vector.shape_cast %87 : vector<1x1x4x256xf32> to vector<4x256xf32>
    %c0_71 = arith.constant 0 : index
    %c17_72 = arith.constant 17 : index
    %89 = vector.load %arg9[%c0_71, %c17_72] : memref<4x290xf32, #tpu.memory_space<vmem>>, vector<4x256xf32>
    tpu.vector_store %arg9[%c0_71, %c17_72], %88 {strides = array<i32>} : memref<4x290xf32, #tpu.memory_space<vmem>>, vector<4x256xf32>,
    %c0_73 = arith.constant 0 : index
    %c0_74 = arith.constant 0 : index
    %90 = vector.load %arg9[%c0_73, %c0_74] : memref<4x290xf32, #tpu.memory_space<vmem>>, vector<4x256xf32>
    %91 = vector.broadcast %6 : vector<1x256xf32> to vector<4x256xf32>
    %92 = arith.mulf %90, %91 : vector<4x256xf32>
    %c0_75 = arith.constant 0 : index
    %c0_76 = arith.constant 0 : index
    %93 = vector.load %arg10[%c0_75, %c0_76] : memref<36x256xf32, #tpu.memory_space<vmem>>, vector<4x256xf32>
    tpu.vector_store %arg10[%c0_75, %c0_76], %92 {strides = array<i32>} : memref<36x256xf32, #tpu.memory_space<vmem>>, vector<4x256xf32>,
    %c0_77 = arith.constant 0 : index
    %c1_78 = arith.constant 1 : index
    %94 = vector.load %arg9[%c0_77, %c1_78] : memref<4x290xf32, #tpu.memory_space<vmem>>, vector<4x256xf32>
    %c4_79 = arith.constant 4 : index
    %c0_80 = arith.constant 0 : index
    %95 = vector.load %arg10[%c4_79, %c0_80] : memref<36x256xf32, #tpu.memory_space<vmem>>, vector<4x256xf32>
    tpu.vector_store %arg10[%c4_79, %c0_80], %94 {strides = array<i32>} : memref<36x256xf32, #tpu.memory_space<vmem>>, vector<4x256xf32>,
    %c0_81 = arith.constant 0 : index
    %c2_82 = arith.constant 2 : index
    %96 = vector.load %arg9[%c0_81, %c2_82] : memref<4x290xf32, #tpu.memory_space<vmem>>, vector<4x256xf32>
    %97 = vector.broadcast %7 : vector<1x256xf32> to vector<4x256xf32>
    %98 = arith.mulf %96, %97 : vector<4x256xf32>
    %c8_83 = arith.constant 8 : index
    %c0_84 = arith.constant 0 : index
    %99 = vector.load %arg10[%c8_83, %c0_84] : memref<36x256xf32, #tpu.memory_space<vmem>>, vector<4x256xf32>
    tpu.vector_store %arg10[%c8_83, %c0_84], %98 {strides = array<i32>} : memref<36x256xf32, #tpu.memory_space<vmem>>, vector<4x256xf32>,
    %c0_85 = arith.constant 0 : index
    %c16_86 = arith.constant 16 : index
    %100 = vector.load %arg9[%c0_85, %c16_86] : memref<4x290xf32, #tpu.memory_space<vmem>>, vector<4x256xf32>
    %101 = vector.broadcast %6 : vector<1x256xf32> to vector<4x256xf32>
    %102 = arith.mulf %100, %101 : vector<4x256xf32>
    %c12_87 = arith.constant 12 : index
    %c0_88 = arith.constant 0 : index
    %103 = vector.load %arg10[%c12_87, %c0_88] : memref<36x256xf32, #tpu.memory_space<vmem>>, vector<4x256xf32>
    tpu.vector_store %arg10[%c12_87, %c0_88], %102 {strides = array<i32>} : memref<36x256xf32, #tpu.memory_space<vmem>>, vector<4x256xf32>,
    %c0_89 = arith.constant 0 : index
    %c17_90 = arith.constant 17 : index
    %104 = vector.load %arg9[%c0_89, %c17_90] : memref<4x290xf32, #tpu.memory_space<vmem>>, vector<4x256xf32>
    %c16_91 = arith.constant 16 : index
    %c0_92 = arith.constant 0 : index
    %105 = vector.load %arg10[%c16_91, %c0_92] : memref<36x256xf32, #tpu.memory_space<vmem>>, vector<4x256xf32>
    tpu.vector_store %arg10[%c16_91, %c0_92], %104 {strides = array<i32>} : memref<36x256xf32, #tpu.memory_space<vmem>>, vector<4x256xf32>,
    %c0_93 = arith.constant 0 : index
    %c18_94 = arith.constant 18 : index
    %106 = vector.load %arg9[%c0_93, %c18_94] : memref<4x290xf32, #tpu.memory_space<vmem>>, vector<4x256xf32>
    %107 = vector.broadcast %7 : vector<1x256xf32> to vector<4x256xf32>
    %108 = arith.mulf %106, %107 : vector<4x256xf32>
    %c20_95 = arith.constant 20 : index
    %c0_96 = arith.constant 0 : index
    %109 = vector.load %arg10[%c20_95, %c0_96] : memref<36x256xf32, #tpu.memory_space<vmem>>, vector<4x256xf32>
    tpu.vector_store %arg10[%c20_95, %c0_96], %108 {strides = array<i32>} : memref<36x256xf32, #tpu.memory_space<vmem>>, vector<4x256xf32>,
    %c0_97 = arith.constant 0 : index
    %c32_98 = arith.constant 32 : index
    %110 = vector.load %arg9[%c0_97, %c32_98] : memref<4x290xf32, #tpu.memory_space<vmem>>, vector<4x256xf32>
    %111 = vector.broadcast %6 : vector<1x256xf32> to vector<4x256xf32>
    %112 = arith.mulf %110, %111 : vector<4x256xf32>
    %c24_99 = arith.constant 24 : index
    %c0_100 = arith.constant 0 : index
    %113 = vector.load %arg10[%c24_99, %c0_100] : memref<36x256xf32, #tpu.memory_space<vmem>>, vector<4x256xf32>
    tpu.vector_store %arg10[%c24_99, %c0_100], %112 {strides = array<i32>} : memref<36x256xf32, #tpu.memory_space<vmem>>, vector<4x256xf32>,
    %c0_101 = arith.constant 0 : index
    %c33_102 = arith.constant 33 : index
    %114 = vector.load %arg9[%c0_101, %c33_102] : memref<4x290xf32, #tpu.memory_space<vmem>>, vector<4x256xf32>
    %c28_103 = arith.constant 28 : index
    %c0_104 = arith.constant 0 : index
    %115 = vector.load %arg10[%c28_103, %c0_104] : memref<36x256xf32, #tpu.memory_space<vmem>>, vector<4x256xf32>
    tpu.vector_store %arg10[%c28_103, %c0_104], %114 {strides = array<i32>} : memref<36x256xf32, #tpu.memory_space<vmem>>, vector<4x256xf32>,
    %c0_105 = arith.constant 0 : index
    %c34_106 = arith.constant 34 : index
    %116 = vector.load %arg9[%c0_105, %c34_106] : memref<4x290xf32, #tpu.memory_space<vmem>>, vector<4x256xf32>
    %117 = vector.broadcast %7 : vector<1x256xf32> to vector<4x256xf32>
    %118 = arith.mulf %116, %117 : vector<4x256xf32>
    %c32_107 = arith.constant 32 : index
    %c0_108 = arith.constant 0 : index
    %119 = vector.load %arg10[%c32_107, %c0_108] : memref<36x256xf32, #tpu.memory_space<vmem>>, vector<4x256xf32>
    tpu.vector_store %arg10[%c32_107, %c0_108], %118 {strides = array<i32>} : memref<36x256xf32, #tpu.memory_space<vmem>>, vector<4x256xf32>,
    %c0_109 = arith.constant 0 : index
    %c0_110 = arith.constant 0 : index
    %120 = vector.load %arg10[%c0_109, %c0_110] : memref<36x256xf32, #tpu.memory_space<vmem>>, vector<36x256xf32>
    %cst_111 = arith.constant dense<0.000000e+00> : vector<16x256xf32>
    %121 = tpu.matmul %3, %120, %cst_111 {dimension_numbers = #tpu.dot_dimension_numbers<[1], [0], [0], [1], [0, 0, 1, 1], [], []>} : vector<16x36xf32>, vector<36x256xf32>, vector<16x256xf32> -> vector<16x256xf32>
    %122 = vector.broadcast %4 : vector<16x1xf32> to vector<16x256xf32>
    %123 = arith.addf %121, %122 : vector<16x256xf32>
    %c3_i32_112 = arith.constant 3 : i32
    %c0_i32_113 = arith.constant 0 : i32
    %124 = arith.cmpi eq, %c3_i32_112, %c0_i32_113 : i32
    %c1_i32_114 = arith.constant 1 : i32
    %125 = arith.select %124, %c1_i32_114, %c3_i32_112 : i32
    %126 = arith.remsi %86, %125 : i32
    %c0_i32_115 = arith.constant 0 : i32
    %127 = arith.cmpi ne, %126, %c0_i32_115 : i32
    %c0_i32_116 = arith.constant 0 : i32
    %128 = arith.cmpi slt, %126, %c0_i32_116 : i32
    %c0_i32_117 = arith.constant 0 : i32
    %129 = arith.cmpi slt, %125, %c0_i32_117 : i32
    %130 = arith.xori %128, %129 : i1
    %131 = arith.andi %130, %127 : i1
    %132 = arith.addi %126, %125 : i32
    %133 = arith.select %131, %132, %126 : i32
    %c16_i32_118 = arith.constant 16 : i32
    %134 = arith.muli %133, %c16_i32_118 : i32
    %135 = arith.index_cast %134 : i32 to index
    %c0_119 = arith.constant 0 : index
    %136 = vector.load %arg11[%135, %c0_119] : memref<48x256xf32, #tpu.memory_space<vmem>>, vector<16x256xf32>
    tpu.vector_store %arg11[%135, %c0_119], %123 {strides = array<i32>} : memref<48x256xf32, #tpu.memory_space<vmem>>, vector<16x256xf32>,
    %c0_i32_120 = arith.constant 0 : i32
    %137 = arith.cmpi eq, %86, %c0_i32_120 : i32
    %c1_i32_121 = arith.constant 1 : i32
    %138 = arith.cmpi eq, %86, %c1_i32_121 : i32
    %c3_i32_122 = arith.constant 3 : i32
    %c0_i32_123 = arith.constant 0 : i32
    %139 = arith.cmpi eq, %c3_i32_122, %c0_i32_123 : i32
    %c1_i32_124 = arith.constant 1 : i32
    %140 = arith.select %139, %c1_i32_124, %c3_i32_122 : i32
    %141 = arith.remsi %86, %140 : i32
    %c0_i32_125 = arith.constant 0 : i32
    %142 = arith.cmpi ne, %141, %c0_i32_125 : i32
    %c0_i32_126 = arith.constant 0 : i32
    %143 = arith.cmpi slt, %141, %c0_i32_126 : i32
    %c0_i32_127 = arith.constant 0 : i32
    %144 = arith.cmpi slt, %140, %c0_i32_127 : i32
    %145 = arith.xori %143, %144 : i1
    %146 = arith.andi %145, %142 : i1
    %147 = arith.addi %141, %140 : i32
    %148 = arith.select %146, %147, %141 : i32
    %c2_i32_128 = arith.constant 2 : i32
    %149 = arith.addi %c2_i32_128, %148 : i32
    %c1_i32_129 = arith.constant 1 : i32
    %150 = arith.select %138, %c1_i32_129, %149 : i32
    %c0_i32_130 = arith.constant 0 : i32
    %151 = arith.select %137, %c0_i32_130, %150 : i32
    %152 = arith.index_cast %151 : i32 to index
    %c0_131 = arith.constant 0 : index
    %c0_132 = arith.constant 0 : index
    %153 = vector.load %arg5[%152, %c0_131, %c0_132] : memref<5x16x48xf32, #tpu.memory_space<vmem>>, vector<1x16x48xf32>
    %154 = vector.shape_cast %153 : vector<1x16x48xf32> to vector<16x48xf32>
    %c0_133 = arith.constant 0 : index
    %c0_134 = arith.constant 0 : index
    %155 = vector.load %arg11[%c0_133, %c0_134] : memref<48x256xf32, #tpu.memory_space<vmem>>, vector<48x256xf32>
    %cst_135 = arith.constant dense<0.000000e+00> : vector<16x256xf32>
    %156 = tpu.matmul %154, %155, %cst_135 {dimension_numbers = #tpu.dot_dimension_numbers<[1], [0], [0], [1], [0, 0, 1, 1], [], []>} : vector<16x48xf32>, vector<48x256xf32>, vector<16x256xf32> -> vector<16x256xf32>
    %157 = vector.broadcast %5 : vector<16x1xf32> to vector<16x256xf32>
    %158 = arith.addf %156, %157 : vector<16x256xf32>
    %c0_136 = arith.constant 0 : index
    %c1_137 = arith.constant 1 : index
    %c0_138 = arith.constant 0 : index
    %c0_139 = arith.constant 0 : index
    %159 = vector.load %arg8[%c0_136, %c1_137, %c0_138, %c0_139] : memref<1x4x16x256xf32, #tpu.memory_space<vmem>>, vector<1x1x16x256xf32>
    %160 = vector.shape_cast %159 : vector<1x1x16x256xf32> to vector<16x256xf32>
    %161 = vector.shape_cast %158 : vector<16x256xf32> to vector<1x1x16x256xf32>
    tpu.vector_store %arg8[%c0_136, %c1_137, %c0_138, %c0_139], %161 {strides = array<i32>} : memref<1x4x16x256xf32, #tpu.memory_space<vmem>>, vector<1x1x16x256xf32>,
    %c4_i32_140 = arith.constant 4 : i32
    %162 = arith.muli %arg1, %c4_i32_140 : i32
    %c2_i32_141 = arith.constant 2 : i32
    %163 = arith.addi %162, %c2_i32_141 : i32
    %c0_142 = arith.constant 0 : index
    %c2_143 = arith.constant 2 : index
    %c0_144 = arith.constant 0 : index
    %c0_145 = arith.constant 0 : index
    %164 = vector.load %arg2[%c0_142, %c2_143, %c0_144, %c0_145] : memref<1x4x4x256xf32, #tpu.memory_space<vmem>>, vector<1x1x4x256xf32>
    %165 = vector.shape_cast %164 : vector<1x1x4x256xf32> to vector<4x256xf32>
    %c0_146 = arith.constant 0 : index
    %c17_147 = arith.constant 17 : index
    %166 = vector.load %arg9[%c0_146, %c17_147] : memref<4x290xf32, #tpu.memory_space<vmem>>, vector<4x256xf32>
    tpu.vector_store %arg9[%c0_146, %c17_147], %165 {strides = array<i32>} : memref<4x290xf32, #tpu.memory_space<vmem>>, vector<4x256xf32>,
    %c0_148 = arith.constant 0 : index
    %c0_149 = arith.constant 0 : index
    %167 = vector.load %arg9[%c0_148, %c0_149] : memref<4x290xf32, #tpu.memory_space<vmem>>, vector<4x256xf32>
    %168 = vector.broadcast %6 : vector<1x256xf32> to vector<4x256xf32>
    %169 = arith.mulf %167, %168 : vector<4x256xf32>
    %c0_150 = arith.constant 0 : index
    %c0_151 = arith.constant 0 : index
    %170 = vector.load %arg10[%c0_150, %c0_151] : memref<36x256xf32, #tpu.memory_space<vmem>>, vector<4x256xf32>
    tpu.vector_store %arg10[%c0_150, %c0_151], %169 {strides = array<i32>} : memref<36x256xf32, #tpu.memory_space<vmem>>, vector<4x256xf32>,
    %c0_152 = arith.constant 0 : index
    %c1_153 = arith.constant 1 : index
    %171 = vector.load %arg9[%c0_152, %c1_153] : memref<4x290xf32, #tpu.memory_space<vmem>>, vector<4x256xf32>
    %c4_154 = arith.constant 4 : index
    %c0_155 = arith.constant 0 : index
    %172 = vector.load %arg10[%c4_154, %c0_155] : memref<36x256xf32, #tpu.memory_space<vmem>>, vector<4x256xf32>
    tpu.vector_store %arg10[%c4_154, %c0_155], %171 {strides = array<i32>} : memref<36x256xf32, #tpu.memory_space<vmem>>, vector<4x256xf32>,
    %c0_156 = arith.constant 0 : index
    %c2_157 = arith.constant 2 : index
    %173 = vector.load %arg9[%c0_156, %c2_157] : memref<4x290xf32, #tpu.memory_space<vmem>>, vector<4x256xf32>
    %174 = vector.broadcast %7 : vector<1x256xf32> to vector<4x256xf32>
    %175 = arith.mulf %173, %174 : vector<4x256xf32>
    %c8_158 = arith.constant 8 : index
    %c0_159 = arith.constant 0 : index
    %176 = vector.load %arg10[%c8_158, %c0_159] : memref<36x256xf32, #tpu.memory_space<vmem>>, vector<4x256xf32>
    tpu.vector_store %arg10[%c8_158, %c0_159], %175 {strides = array<i32>} : memref<36x256xf32, #tpu.memory_space<vmem>>, vector<4x256xf32>,
    %c0_160 = arith.constant 0 : index
    %c16_161 = arith.constant 16 : index
    %177 = vector.load %arg9[%c0_160, %c16_161] : memref<4x290xf32, #tpu.memory_space<vmem>>, vector<4x256xf32>
    %178 = vector.broadcast %6 : vector<1x256xf32> to vector<4x256xf32>
    %179 = arith.mulf %177, %178 : vector<4x256xf32>
    %c12_162 = arith.constant 12 : index
    %c0_163 = arith.constant 0 : index
    %180 = vector.load %arg10[%c12_162, %c0_163] : memref<36x256xf32, #tpu.memory_space<vmem>>, vector<4x256xf32>
    tpu.vector_store %arg10[%c12_162, %c0_163], %179 {strides = array<i32>} : memref<36x256xf32, #tpu.memory_space<vmem>>, vector<4x256xf32>,
    %c0_164 = arith.constant 0 : index
    %c17_165 = arith.constant 17 : index
    %181 = vector.load %arg9[%c0_164, %c17_165] : memref<4x290xf32, #tpu.memory_space<vmem>>, vector<4x256xf32>
    %c16_166 = arith.constant 16 : index
    %c0_167 = arith.constant 0 : index
    %182 = vector.load %arg10[%c16_166, %c0_167] : memref<36x256xf32, #tpu.memory_space<vmem>>, vector<4x256xf32>
    tpu.vector_store %arg10[%c16_166, %c0_167], %181 {strides = array<i32>} : memref<36x256xf32, #tpu.memory_space<vmem>>, vector<4x256xf32>,
    %c0_168 = arith.constant 0 : index
    %c18_169 = arith.constant 18 : index
    %183 = vector.load %arg9[%c0_168, %c18_169] : memref<4x290xf32, #tpu.memory_space<vmem>>, vector<4x256xf32>
    %184 = vector.broadcast %7 : vector<1x256xf32> to vector<4x256xf32>
    %185 = arith.mulf %183, %184 : vector<4x256xf32>
    %c20_170 = arith.constant 20 : index
    %c0_171 = arith.constant 0 : index
    %186 = vector.load %arg10[%c20_170, %c0_171] : memref<36x256xf32, #tpu.memory_space<vmem>>, vector<4x256xf32>
    tpu.vector_store %arg10[%c20_170, %c0_171], %185 {strides = array<i32>} : memref<36x256xf32, #tpu.memory_space<vmem>>, vector<4x256xf32>,
    %c0_172 = arith.constant 0 : index
    %c32_173 = arith.constant 32 : index
    %187 = vector.load %arg9[%c0_172, %c32_173] : memref<4x290xf32, #tpu.memory_space<vmem>>, vector<4x256xf32>
    %188 = vector.broadcast %6 : vector<1x256xf32> to vector<4x256xf32>
    %189 = arith.mulf %187, %188 : vector<4x256xf32>
    %c24_174 = arith.constant 24 : index
    %c0_175 = arith.constant 0 : index
    %190 = vector.load %arg10[%c24_174, %c0_175] : memref<36x256xf32, #tpu.memory_space<vmem>>, vector<4x256xf32>
    tpu.vector_store %arg10[%c24_174, %c0_175], %189 {strides = array<i32>} : memref<36x256xf32, #tpu.memory_space<vmem>>, vector<4x256xf32>,
    %c0_176 = arith.constant 0 : index
    %c33_177 = arith.constant 33 : index
    %191 = vector.load %arg9[%c0_176, %c33_177] : memref<4x290xf32, #tpu.memory_space<vmem>>, vector<4x256xf32>
    %c28_178 = arith.constant 28 : index
    %c0_179 = arith.constant 0 : index
    %192 = vector.load %arg10[%c28_178, %c0_179] : memref<36x256xf32, #tpu.memory_space<vmem>>, vector<4x256xf32>
    tpu.vector_store %arg10[%c28_178, %c0_179], %191 {strides = array<i32>} : memref<36x256xf32, #tpu.memory_space<vmem>>, vector<4x256xf32>,
    %c0_180 = arith.constant 0 : index
    %c34_181 = arith.constant 34 : index
    %193 = vector.load %arg9[%c0_180, %c34_181] : memref<4x290xf32, #tpu.memory_space<vmem>>, vector<4x256xf32>
    %194 = vector.broadcast %7 : vector<1x256xf32> to vector<4x256xf32>
    %195 = arith.mulf %193, %194 : vector<4x256xf32>
    %c32_182 = arith.constant 32 : index
    %c0_183 = arith.constant 0 : index
    %196 = vector.load %arg10[%c32_182, %c0_183] : memref<36x256xf32, #tpu.memory_space<vmem>>, vector<4x256xf32>
    tpu.vector_store %arg10[%c32_182, %c0_183], %195 {strides = array<i32>} : memref<36x256xf32, #tpu.memory_space<vmem>>, vector<4x256xf32>,
    %c0_184 = arith.constant 0 : index
    %c0_185 = arith.constant 0 : index
    %197 = vector.load %arg10[%c0_184, %c0_185] : memref<36x256xf32, #tpu.memory_space<vmem>>, vector<36x256xf32>
    %cst_186 = arith.constant dense<0.000000e+00> : vector<16x256xf32>
    %198 = tpu.matmul %3, %197, %cst_186 {dimension_numbers = #tpu.dot_dimension_numbers<[1], [0], [0], [1], [0, 0, 1, 1], [], []>} : vector<16x36xf32>, vector<36x256xf32>, vector<16x256xf32> -> vector<16x256xf32>
    %199 = vector.broadcast %4 : vector<16x1xf32> to vector<16x256xf32>
    %200 = arith.addf %198, %199 : vector<16x256xf32>
    %c3_i32_187 = arith.constant 3 : i32
    %c0_i32_188 = arith.constant 0 : i32
    %201 = arith.cmpi eq, %c3_i32_187, %c0_i32_188 : i32
    %c1_i32_189 = arith.constant 1 : i32
    %202 = arith.select %201, %c1_i32_189, %c3_i32_187 : i32
    %203 = arith.remsi %163, %202 : i32
    %c0_i32_190 = arith.constant 0 : i32
    %204 = arith.cmpi ne, %203, %c0_i32_190 : i32
    %c0_i32_191 = arith.constant 0 : i32
    %205 = arith.cmpi slt, %203, %c0_i32_191 : i32
    %c0_i32_192 = arith.constant 0 : i32
    %206 = arith.cmpi slt, %202, %c0_i32_192 : i32
    %207 = arith.xori %205, %206 : i1
    %208 = arith.andi %207, %204 : i1
    %209 = arith.addi %203, %202 : i32
    %210 = arith.select %208, %209, %203 : i32
    %c16_i32_193 = arith.constant 16 : i32
    %211 = arith.muli %210, %c16_i32_193 : i32
    %212 = arith.index_cast %211 : i32 to index
    %c0_194 = arith.constant 0 : index
    %213 = vector.load %arg11[%212, %c0_194] : memref<48x256xf32, #tpu.memory_space<vmem>>, vector<16x256xf32>
    tpu.vector_store %arg11[%212, %c0_194], %200 {strides = array<i32>} : memref<48x256xf32, #tpu.memory_space<vmem>>, vector<16x256xf32>,
    %c0_i32_195 = arith.constant 0 : i32
    %214 = arith.cmpi eq, %163, %c0_i32_195 : i32
    %c1_i32_196 = arith.constant 1 : i32
    %215 = arith.cmpi eq, %163, %c1_i32_196 : i32
    %c3_i32_197 = arith.constant 3 : i32
    %c0_i32_198 = arith.constant 0 : i32
    %216 = arith.cmpi eq, %c3_i32_197, %c0_i32_198 : i32
    %c1_i32_199 = arith.constant 1 : i32
    %217 = arith.select %216, %c1_i32_199, %c3_i32_197 : i32
    %218 = arith.remsi %163, %217 : i32
    %c0_i32_200 = arith.constant 0 : i32
    %219 = arith.cmpi ne, %218, %c0_i32_200 : i32
    %c0_i32_201 = arith.constant 0 : i32
    %220 = arith.cmpi slt, %218, %c0_i32_201 : i32
    %c0_i32_202 = arith.constant 0 : i32
    %221 = arith.cmpi slt, %217, %c0_i32_202 : i32
    %222 = arith.xori %220, %221 : i1
    %223 = arith.andi %222, %219 : i1
    %224 = arith.addi %218, %217 : i32
    %225 = arith.select %223, %224, %218 : i32
    %c2_i32_203 = arith.constant 2 : i32
    %226 = arith.addi %c2_i32_203, %225 : i32
    %c1_i32_204 = arith.constant 1 : i32
    %227 = arith.select %215, %c1_i32_204, %226 : i32
    %c0_i32_205 = arith.constant 0 : i32
    %228 = arith.select %214, %c0_i32_205, %227 : i32
    %229 = arith.index_cast %228 : i32 to index
    %c0_206 = arith.constant 0 : index
    %c0_207 = arith.constant 0 : index
    %230 = vector.load %arg5[%229, %c0_206, %c0_207] : memref<5x16x48xf32, #tpu.memory_space<vmem>>, vector<1x16x48xf32>
    %231 = vector.shape_cast %230 : vector<1x16x48xf32> to vector<16x48xf32>
    %c0_208 = arith.constant 0 : index
    %c0_209 = arith.constant 0 : index
    %232 = vector.load %arg11[%c0_208, %c0_209] : memref<48x256xf32, #tpu.memory_space<vmem>>, vector<48x256xf32>
    %cst_210 = arith.constant dense<0.000000e+00> : vector<16x256xf32>
    %233 = tpu.matmul %231, %232, %cst_210 {dimension_numbers = #tpu.dot_dimension_numbers<[1], [0], [0], [1], [0, 0, 1, 1], [], []>} : vector<16x48xf32>, vector<48x256xf32>, vector<16x256xf32> -> vector<16x256xf32>
    %234 = vector.broadcast %5 : vector<16x1xf32> to vector<16x256xf32>
    %235 = arith.addf %233, %234 : vector<16x256xf32>
    %c0_211 = arith.constant 0 : index
    %c2_212 = arith.constant 2 : index
    %c0_213 = arith.constant 0 : index
    %c0_214 = arith.constant 0 : index
    %236 = vector.load %arg8[%c0_211, %c2_212, %c0_213, %c0_214] : memref<1x4x16x256xf32, #tpu.memory_space<vmem>>, vector<1x1x16x256xf32>
    %237 = vector.shape_cast %236 : vector<1x1x16x256xf32> to vector<16x256xf32>
    %238 = vector.shape_cast %235 : vector<16x256xf32> to vector<1x1x16x256xf32>
    tpu.vector_store %arg8[%c0_211, %c2_212, %c0_213, %c0_214], %238 {strides = array<i32>} : memref<1x4x16x256xf32, #tpu.memory_space<vmem>>, vector<1x1x16x256xf32>,
    %c4_i32_215 = arith.constant 4 : i32
    %239 = arith.muli %arg1, %c4_i32_215 : i32
    %c3_i32_216 = arith.constant 3 : i32
    %240 = arith.addi %239, %c3_i32_216 : i32
    %c0_217 = arith.constant 0 : index
    %c3 = arith.constant 3 : index
    %c0_218 = arith.constant 0 : index
    %c0_219 = arith.constant 0 : index
    %241 = vector.load %arg2[%c0_217, %c3, %c0_218, %c0_219] : memref<1x4x4x256xf32, #tpu.memory_space<vmem>>, vector<1x1x4x256xf32>
    %242 = vector.shape_cast %241 : vector<1x1x4x256xf32> to vector<4x256xf32>
    %c0_220 = arith.constant 0 : index
    %c17_221 = arith.constant 17 : index
    %243 = vector.load %arg9[%c0_220, %c17_221] : memref<4x290xf32, #tpu.memory_space<vmem>>, vector<4x256xf32>
    tpu.vector_store %arg9[%c0_220, %c17_221], %242 {strides = array<i32>} : memref<4x290xf32, #tpu.memory_space<vmem>>, vector<4x256xf32>,
    %c0_222 = arith.constant 0 : index
    %c0_223 = arith.constant 0 : index
    %244 = vector.load %arg9[%c0_222, %c0_223] : memref<4x290xf32, #tpu.memory_space<vmem>>, vector<4x256xf32>
    %245 = vector.broadcast %6 : vector<1x256xf32> to vector<4x256xf32>
    %246 = arith.mulf %244, %245 : vector<4x256xf32>
    %c0_224 = arith.constant 0 : index
    %c0_225 = arith.constant 0 : index
    %247 = vector.load %arg10[%c0_224, %c0_225] : memref<36x256xf32, #tpu.memory_space<vmem>>, vector<4x256xf32>
    tpu.vector_store %arg10[%c0_224, %c0_225], %246 {strides = array<i32>} : memref<36x256xf32, #tpu.memory_space<vmem>>, vector<4x256xf32>,
    %c0_226 = arith.constant 0 : index
    %c1_227 = arith.constant 1 : index
    %248 = vector.load %arg9[%c0_226, %c1_227] : memref<4x290xf32, #tpu.memory_space<vmem>>, vector<4x256xf32>
    %c4_228 = arith.constant 4 : index
    %c0_229 = arith.constant 0 : index
    %249 = vector.load %arg10[%c4_228, %c0_229] : memref<36x256xf32, #tpu.memory_space<vmem>>, vector<4x256xf32>
    tpu.vector_store %arg10[%c4_228, %c0_229], %248 {strides = array<i32>} : memref<36x256xf32, #tpu.memory_space<vmem>>, vector<4x256xf32>,
    %c0_230 = arith.constant 0 : index
    %c2_231 = arith.constant 2 : index
    %250 = vector.load %arg9[%c0_230, %c2_231] : memref<4x290xf32, #tpu.memory_space<vmem>>, vector<4x256xf32>
    %251 = vector.broadcast %7 : vector<1x256xf32> to vector<4x256xf32>
    %252 = arith.mulf %250, %251 : vector<4x256xf32>
    %c8_232 = arith.constant 8 : index
    %c0_233 = arith.constant 0 : index
    %253 = vector.load %arg10[%c8_232, %c0_233] : memref<36x256xf32, #tpu.memory_space<vmem>>, vector<4x256xf32>
    tpu.vector_store %arg10[%c8_232, %c0_233], %252 {strides = array<i32>} : memref<36x256xf32, #tpu.memory_space<vmem>>, vector<4x256xf32>,
    %c0_234 = arith.constant 0 : index
    %c16_235 = arith.constant 16 : index
    %254 = vector.load %arg9[%c0_234, %c16_235] : memref<4x290xf32, #tpu.memory_space<vmem>>, vector<4x256xf32>
    %255 = vector.broadcast %6 : vector<1x256xf32> to vector<4x256xf32>
    %256 = arith.mulf %254, %255 : vector<4x256xf32>
    %c12_236 = arith.constant 12 : index
    %c0_237 = arith.constant 0 : index
    %257 = vector.load %arg10[%c12_236, %c0_237] : memref<36x256xf32, #tpu.memory_space<vmem>>, vector<4x256xf32>
    tpu.vector_store %arg10[%c12_236, %c0_237], %256 {strides = array<i32>} : memref<36x256xf32, #tpu.memory_space<vmem>>, vector<4x256xf32>,
    %c0_238 = arith.constant 0 : index
    %c17_239 = arith.constant 17 : index
    %258 = vector.load %arg9[%c0_238, %c17_239] : memref<4x290xf32, #tpu.memory_space<vmem>>, vector<4x256xf32>
    %c16_240 = arith.constant 16 : index
    %c0_241 = arith.constant 0 : index
    %259 = vector.load %arg10[%c16_240, %c0_241] : memref<36x256xf32, #tpu.memory_space<vmem>>, vector<4x256xf32>
    tpu.vector_store %arg10[%c16_240, %c0_241], %258 {strides = array<i32>} : memref<36x256xf32, #tpu.memory_space<vmem>>, vector<4x256xf32>,
    %c0_242 = arith.constant 0 : index
    %c18_243 = arith.constant 18 : index
    %260 = vector.load %arg9[%c0_242, %c18_243] : memref<4x290xf32, #tpu.memory_space<vmem>>, vector<4x256xf32>
    %261 = vector.broadcast %7 : vector<1x256xf32> to vector<4x256xf32>
    %262 = arith.mulf %260, %261 : vector<4x256xf32>
    %c20_244 = arith.constant 20 : index
    %c0_245 = arith.constant 0 : index
    %263 = vector.load %arg10[%c20_244, %c0_245] : memref<36x256xf32, #tpu.memory_space<vmem>>, vector<4x256xf32>
    tpu.vector_store %arg10[%c20_244, %c0_245], %262 {strides = array<i32>} : memref<36x256xf32, #tpu.memory_space<vmem>>, vector<4x256xf32>,
    %c0_246 = arith.constant 0 : index
    %c32_247 = arith.constant 32 : index
    %264 = vector.load %arg9[%c0_246, %c32_247] : memref<4x290xf32, #tpu.memory_space<vmem>>, vector<4x256xf32>
    %265 = vector.broadcast %6 : vector<1x256xf32> to vector<4x256xf32>
    %266 = arith.mulf %264, %265 : vector<4x256xf32>
    %c24_248 = arith.constant 24 : index
    %c0_249 = arith.constant 0 : index
    %267 = vector.load %arg10[%c24_248, %c0_249] : memref<36x256xf32, #tpu.memory_space<vmem>>, vector<4x256xf32>
    tpu.vector_store %arg10[%c24_248, %c0_249], %266 {strides = array<i32>} : memref<36x256xf32, #tpu.memory_space<vmem>>, vector<4x256xf32>,
    %c0_250 = arith.constant 0 : index
    %c33_251 = arith.constant 33 : index
    %268 = vector.load %arg9[%c0_250, %c33_251] : memref<4x290xf32, #tpu.memory_space<vmem>>, vector<4x256xf32>
    %c28_252 = arith.constant 28 : index
    %c0_253 = arith.constant 0 : index
    %269 = vector.load %arg10[%c28_252, %c0_253] : memref<36x256xf32, #tpu.memory_space<vmem>>, vector<4x256xf32>
    tpu.vector_store %arg10[%c28_252, %c0_253], %268 {strides = array<i32>} : memref<36x256xf32, #tpu.memory_space<vmem>>, vector<4x256xf32>,
    %c0_254 = arith.constant 0 : index
    %c34_255 = arith.constant 34 : index
    %270 = vector.load %arg9[%c0_254, %c34_255] : memref<4x290xf32, #tpu.memory_space<vmem>>, vector<4x256xf32>
    %271 = vector.broadcast %7 : vector<1x256xf32> to vector<4x256xf32>
    %272 = arith.mulf %270, %271 : vector<4x256xf32>
    %c32_256 = arith.constant 32 : index
    %c0_257 = arith.constant 0 : index
    %273 = vector.load %arg10[%c32_256, %c0_257] : memref<36x256xf32, #tpu.memory_space<vmem>>, vector<4x256xf32>
    tpu.vector_store %arg10[%c32_256, %c0_257], %272 {strides = array<i32>} : memref<36x256xf32, #tpu.memory_space<vmem>>, vector<4x256xf32>,
    %c0_258 = arith.constant 0 : index
    %c0_259 = arith.constant 0 : index
    %274 = vector.load %arg10[%c0_258, %c0_259] : memref<36x256xf32, #tpu.memory_space<vmem>>, vector<36x256xf32>
    %cst_260 = arith.constant dense<0.000000e+00> : vector<16x256xf32>
    %275 = tpu.matmul %3, %274, %cst_260 {dimension_numbers = #tpu.dot_dimension_numbers<[1], [0], [0], [1], [0, 0, 1, 1], [], []>} : vector<16x36xf32>, vector<36x256xf32>, vector<16x256xf32> -> vector<16x256xf32>
    %276 = vector.broadcast %4 : vector<16x1xf32> to vector<16x256xf32>
    %277 = arith.addf %275, %276 : vector<16x256xf32>
    %c3_i32_261 = arith.constant 3 : i32
    %c0_i32_262 = arith.constant 0 : i32
    %278 = arith.cmpi eq, %c3_i32_261, %c0_i32_262 : i32
    %c1_i32_263 = arith.constant 1 : i32
    %279 = arith.select %278, %c1_i32_263, %c3_i32_261 : i32
    %280 = arith.remsi %240, %279 : i32
    %c0_i32_264 = arith.constant 0 : i32
    %281 = arith.cmpi ne, %280, %c0_i32_264 : i32
    %c0_i32_265 = arith.constant 0 : i32
    %282 = arith.cmpi slt, %280, %c0_i32_265 : i32
    %c0_i32_266 = arith.constant 0 : i32
    %283 = arith.cmpi slt, %279, %c0_i32_266 : i32
    %284 = arith.xori %282, %283 : i1
    %285 = arith.andi %284, %281 : i1
    %286 = arith.addi %280, %279 : i32
    %287 = arith.select %285, %286, %280 : i32
    %c16_i32_267 = arith.constant 16 : i32
    %288 = arith.muli %287, %c16_i32_267 : i32
    %289 = arith.index_cast %288 : i32 to index
    %c0_268 = arith.constant 0 : index
    %290 = vector.load %arg11[%289, %c0_268] : memref<48x256xf32, #tpu.memory_space<vmem>>, vector<16x256xf32>
    tpu.vector_store %arg11[%289, %c0_268], %277 {strides = array<i32>} : memref<48x256xf32, #tpu.memory_space<vmem>>, vector<16x256xf32>,
    %c0_i32_269 = arith.constant 0 : i32
    %291 = arith.cmpi eq, %240, %c0_i32_269 : i32
    %c1_i32_270 = arith.constant 1 : i32
    %292 = arith.cmpi eq, %240, %c1_i32_270 : i32
    %c3_i32_271 = arith.constant 3 : i32
    %c0_i32_272 = arith.constant 0 : i32
    %293 = arith.cmpi eq, %c3_i32_271, %c0_i32_272 : i32
    %c1_i32_273 = arith.constant 1 : i32
    %294 = arith.select %293, %c1_i32_273, %c3_i32_271 : i32
    %295 = arith.remsi %240, %294 : i32
    %c0_i32_274 = arith.constant 0 : i32
    %296 = arith.cmpi ne, %295, %c0_i32_274 : i32
    %c0_i32_275 = arith.constant 0 : i32
    %297 = arith.cmpi slt, %295, %c0_i32_275 : i32
    %c0_i32_276 = arith.constant 0 : i32
    %298 = arith.cmpi slt, %294, %c0_i32_276 : i32
    %299 = arith.xori %297, %298 : i1
    %300 = arith.andi %299, %296 : i1
    %301 = arith.addi %295, %294 : i32
    %302 = arith.select %300, %301, %295 : i32
    %c2_i32_277 = arith.constant 2 : i32
    %303 = arith.addi %c2_i32_277, %302 : i32
    %c1_i32_278 = arith.constant 1 : i32
    %304 = arith.select %292, %c1_i32_278, %303 : i32
    %c0_i32_279 = arith.constant 0 : i32
    %305 = arith.select %291, %c0_i32_279, %304 : i32
    %306 = arith.index_cast %305 : i32 to index
    %c0_280 = arith.constant 0 : index
    %c0_281 = arith.constant 0 : index
    %307 = vector.load %arg5[%306, %c0_280, %c0_281] : memref<5x16x48xf32, #tpu.memory_space<vmem>>, vector<1x16x48xf32>
    %308 = vector.shape_cast %307 : vector<1x16x48xf32> to vector<16x48xf32>
    %c0_282 = arith.constant 0 : index
    %c0_283 = arith.constant 0 : index
    %309 = vector.load %arg11[%c0_282, %c0_283] : memref<48x256xf32, #tpu.memory_space<vmem>>, vector<48x256xf32>
    %cst_284 = arith.constant dense<0.000000e+00> : vector<16x256xf32>
    %310 = tpu.matmul %308, %309, %cst_284 {dimension_numbers = #tpu.dot_dimension_numbers<[1], [0], [0], [1], [0, 0, 1, 1], [], []>} : vector<16x48xf32>, vector<48x256xf32>, vector<16x256xf32> -> vector<16x256xf32>
    %311 = vector.broadcast %5 : vector<16x1xf32> to vector<16x256xf32>
    %312 = arith.addf %310, %311 : vector<16x256xf32>
    %c0_285 = arith.constant 0 : index
    %c3_286 = arith.constant 3 : index
    %c0_287 = arith.constant 0 : index
    %c0_288 = arith.constant 0 : index
    %313 = vector.load %arg8[%c0_285, %c3_286, %c0_287, %c0_288] : memref<1x4x16x256xf32, #tpu.memory_space<vmem>>, vector<1x1x16x256xf32>
    %314 = vector.shape_cast %313 : vector<1x1x16x256xf32> to vector<16x256xf32>
    %315 = vector.shape_cast %312 : vector<16x256xf32> to vector<1x1x16x256xf32>
    tpu.vector_store %arg8[%c0_285, %c3_286, %c0_287, %c0_288], %315 {strides = array<i32>} : memref<1x4x16x256xf32, #tpu.memory_space<vmem>>, vector<1x1x16x256xf32>,
    return
  }
  func.func @transform_0(%arg0: i32, %arg1: i32) -> (i32, i32, i32, i32) {
    %c0_i32 = arith.constant 0 : i32
    %c0_i32_0 = arith.constant 0 : i32
    %c0_i32_1 = arith.constant 0 : i32
    return %arg0, %arg1, %c0_i32, %c0_i32_0 : i32, i32, i32, i32
  }
  func.func @transform_1(%arg0: i32, %arg1: i32) -> (i32, i32) {
    %c0_i32 = arith.constant 0 : i32
    %c0_i32_0 = arith.constant 0 : i32
    %c0_i32_1 = arith.constant 0 : i32
    return %c0_i32, %c0_i32_0 : i32, i32
  }
  func.func @transform_2(%arg0: i32, %arg1: i32) -> (i32, i32) {
    %c0_i32 = arith.constant 0 : i32
    %c0_i32_0 = arith.constant 0 : i32
    %c0_i32_1 = arith.constant 0 : i32
    return %c0_i32, %c0_i32_0 : i32, i32
  }
  func.func @transform_3(%arg0: i32, %arg1: i32) -> (i32, i32, i32) {
    %c0_i32 = arith.constant 0 : i32
    %c0_i32_0 = arith.constant 0 : i32
    %c0_i32_1 = arith.constant 0 : i32
    %c0_i32_2 = arith.constant 0 : i32
    return %c0_i32, %c0_i32_0, %c0_i32_1 : i32, i32, i32
  }
  func.func @transform_4(%arg0: i32, %arg1: i32) -> (i32, i32) {
    %c0_i32 = arith.constant 0 : i32
    %c0_i32_0 = arith.constant 0 : i32
    %c0_i32_1 = arith.constant 0 : i32
    return %c0_i32, %c0_i32_0 : i32, i32
  }
  func.func @transform_5(%arg0: i32, %arg1: i32) -> (i32, i32) {
    %c0_i32 = arith.constant 0 : i32
    %c0_i32_0 = arith.constant 0 : i32
    %c0_i32_1 = arith.constant 0 : i32
    return %c0_i32, %c0_i32_0 : i32, i32
  }
  func.func @transform_6(%arg0: i32, %arg1: i32) -> (i32, i32, i32, i32) {
    %c0_i32 = arith.constant 0 : i32
    %c0_i32_0 = arith.constant 0 : i32
    %c0_i32_1 = arith.constant 0 : i32
    return %arg0, %arg1, %c0_i32, %c0_i32_0 : i32, i32, i32, i32
  }
}

</mosaic_0001>

<llo_original>
// kernel: cosmos_conv_projection_3d.1
$region0: #{cosmos_conv_projection_3d.1}
  #allocation0 [shape = 'u32[]', space=smem, size = 0x4, offset = 0x4, fixed_abs, tag = 'smem constant byte address 0x4 - core index']
  #allocation1 [shape = 'u32[72,128]{1,0:T(1,128)}', space=vmem, size = 0x9000, scoped, tag = 'internal scratch']
  #allocation2 [shape = 'f32[4,290]{1,0:T(4,128)}', space=vmem, size = 0x1800, scoped, tag = 'scratch operand']
  #allocation3 [shape = 'f32[36,256]{1,0:T(8,128)}', space=vmem, size = 0xa000, scoped, tag = 'scratch operand']
  #allocation4 [shape = 'f32[48,256]{1,0:T(8,128)}', space=vmem, size = 0xc000, scoped, tag = 'scratch operand']
  %s0 = inlined_call_operand.vmem [shape: f32[2,8,4,256], index: 0, kind: input, shape index: {}]
  %s1 = inlined_call_operand.vmem [shape: f32[16,36], index: 1, kind: input, shape index: {}]
  %s2 = inlined_call_operand.vmem [shape: f32[16,1], index: 2, kind: input, shape index: {}]
  %s3 = inlined_call_operand.vmem [shape: f32[5,16,48], index: 3, kind: input, shape index: {}]
  %s4 = inlined_call_operand.vmem [shape: f32[16,1], index: 4, kind: input, shape index: {}]
  %s5 = inlined_call_operand.vmem [shape: f32[2,256], index: 5, kind: input, shape index: {}]
  %s6 = inlined_call_operand.vmem [shape: f32[2,8,16,256], index: 6, kind: output, shape index: {}]
  %s7 = sld [smem:[#allocation0]]
  $region61: #{cosmos_conv_projection_3d.1} parent=0
    _
  %s9 = ssub.s32 1, %s7
  %s10 = scalar_select 0, %s9, %s7
  loop: start=0, step=1, limit=6
  $region2: #{cosmos_conv_projection_3d.1} parent=0 // loop_pre_header
    _
  $region3: #{cosmos_conv_projection_3d.1} parent=0 // loop_header
    %s12 = sphi 0, %s16
    %p13 = scmp.ge.s32.totalorder %s12, 6
    %s19 = sphi 0, %s31
    %s20 = sphi 0, %s27
    %s21 = sphi 0, %s19
    %s22 = sphi 0, %s20
    %s23 = sphi 0, %s21
    %s24 = sphi 0, %s22
    %s36 = sphi 0, %s38
    %s39 = sphi 0, %s36
    %s40 = sphi 0, %s39
    %s56 = sphi 0, %s40
    %s60 = sphi 0, %s60
    %s62 = sphi 0, %s60
    %s63 = sphi 0, %s62
    %s77 = sphi 0, %s63
    %s81 = sphi 0, %s81
    %s83 = sphi 0, %s81
    %s84 = sphi 0, %s83
    %s98 = sphi 0, %s84
    %s102 = sphi 0, %s102
    %s104 = sphi 0, %s102
    %s105 = sphi 0, %s104
    %s119 = sphi 0, %s105
    %s123 = sphi 0, %s123
    %s125 = sphi 0, %s123
    %s126 = sphi 0, %s125
    %s140 = sphi 0, %s126
    %s144 = sphi 0, %s144
    %s146 = sphi 0, %s144
    %s147 = sphi 0, %s146
    %s161 = sphi 0, %s147
    %s169 = sphi 0, %s171
    %s172 = sphi 0, %s169
    %s173 = sphi 0, %s172
    %s189 = sphi 0, %s173
  $region4: #{cosmos_conv_projection_3d.1} parent=0 // loop_header_branch
    %15 = sbr.rel (%p13) target = $region8
  $region5: #{cosmos_conv_projection_3d.1} parent=0 // loop_body
    %s17 = ssub.s32 %s12, 1
    %s18 = ssub.s32 %s12, 2
    %s25 = sadd.s32 1, %s20
    %p26 = scmp.ge.s32.totalorder %s25, 2
    %s27 = scalar_select %p26, 0, %s25
    %s28 = sadd.s32 1, %s19
    %s29 = scalar_select %p26, %s28, %s19
    %p30 = scmp.ge.s32.totalorder %s29, 2
    %s31 = scalar_select %p30, 0, %s29
    %s32 = ssub.s32 %s19, %s31
    %s33 = ssub.s32 %s20, %s27
    %s34 = sor.u32 %s32, %s33
    %p35 = scmp.eq.s32.totalorder %s34, 0
    %s37 = sadd.s32 %s36, 1
    %s38 = scalar_select %p35, %s36, %s37
    %p41 = pneg %p35
    %p42 = scmp.eq.s32.totalorder %s12, 3
    %p43 = por %p41, %p42
    %p44 = scmp.ne.s32.totalorder %s36, %s39
    %p45 = scmp.eq.s32.totalorder %s12, 0
    %p46 = por %p44, %p45
    %p47 = scmp.ne.s32.totalorder %s36, %s39
    %p48 = scmp.eq.s32.totalorder %s17, 3
    %p49 = por %p47, %p48
    %p50 = scmp.ne.s32.totalorder %s39, %s40
    %p51 = scmp.eq.s32.totalorder %s17, 0
    %p52 = por %p50, %p51
    %p53 = scmp.ne.s32.totalorder %s39, %s40
    %p54 = scmp.eq.s32.totalorder %s18, 3
    %p55 = por %p53, %p54
    %p57 = scmp.ne.s32.totalorder %s40, %s56
    %p58 = scmp.eq.s32.totalorder %s18, 0
    %p59 = por %p57, %p58
    %s61 = sadd.s32 %s60, 1
    %p64 = scmp.eq.s32.totalorder %s12, 3
    %p65 = scmp.ne.s32.totalorder %s60, %s62
    %p66 = scmp.eq.s32.totalorder %s12, 0
    %p67 = por %p65, %p66
    %p68 = scmp.ne.s32.totalorder %s60, %s62
    %p69 = scmp.eq.s32.totalorder %s17, 3
    %p70 = por %p68, %p69
    %p71 = scmp.ne.s32.totalorder %s62, %s63
    %p72 = scmp.eq.s32.totalorder %s17, 0
    %p73 = por %p71, %p72
    %p74 = scmp.ne.s32.totalorder %s62, %s63
    %p75 = scmp.eq.s32.totalorder %s18, 3
    %p76 = por %p74, %p75
    %p78 = scmp.ne.s32.totalorder %s63, %s77
    %p79 = scmp.eq.s32.totalorder %s18, 0
    %p80 = por %p78, %p79
    %s82 = sadd.s32 %s81, 1
    %p85 = scmp.eq.s32.totalorder %s12, 3
    %p86 = scmp.ne.s32.totalorder %s81, %s83
    %p87 = scmp.eq.s32.totalorder %s12, 0
    %p88 = por %p86, %p87
    %p89 = scmp.ne.s32.totalorder %s81, %s83
    %p90 = scmp.eq.s32.totalorder %s17, 3
    %p91 = por %p89, %p90
    %p92 = scmp.ne.s32.totalorder %s83, %s84
    %p93 = scmp.eq.s32.totalorder %s17, 0
    %p94 = por %p92, %p93
    %p95 = scmp.ne.s32.totalorder %s83, %s84
    %p96 = scmp.eq.s32.totalorder %s18, 3
    %p97 = por %p95, %p96
    %p99 = scmp.ne.s32.totalorder %s84, %s98
    %p100 = scmp.eq.s32.totalorder %s18, 0
    %p101 = por %p99, %p100
    %s103 = sadd.s32 %s102, 1
    %p106 = scmp.eq.s32.totalorder %s12, 3
    %p107 = scmp.ne.s32.totalorder %s102, %s104
    %p108 = scmp.eq.s32.totalorder %s12, 0
    %p109 = por %p107, %p108
    %p110 = scmp.ne.s32.totalorder %s102, %s104
    %p111 = scmp.eq.s32.totalorder %s17, 3
    %p112 = por %p110, %p111
    %p113 = scmp.ne.s32.totalorder %s104, %s105
    %p114 = scmp.eq.s32.totalorder %s17, 0
    %p115 = por %p113, %p114
    %p116 = scmp.ne.s32.totalorder %s104, %s105
    %p117 = scmp.eq.s32.totalorder %s18, 3
    %p118 = por %p116, %p117
    %p120 = scmp.ne.s32.totalorder %s105, %s119
    %p121 = scmp.eq.s32.totalorder %s18, 0
    %p122 = por %p120, %p121
    %s124 = sadd.s32 %s123, 1
    %p127 = scmp.eq.s32.totalorder %s12, 3
    %p128 = scmp.ne.s32.totalorder %s123, %s125
    %p129 = scmp.eq.s32.totalorder %s12, 0
    %p130 = por %p128, %p129
    %p131 = scmp.ne.s32.totalorder %s123, %s125
    %p132 = scmp.eq.s32.totalorder %s17, 3
    %p133 = por %p131, %p132
    %p134 = scmp.ne.s32.totalorder %s125, %s126
    %p135 = scmp.eq.s32.totalorder %s17, 0
    %p136 = por %p134, %p135
    %p137 = scmp.ne.s32.totalorder %s125, %s126
    %p138 = scmp.eq.s32.totalorder %s18, 3
    %p139 = por %p137, %p138
    %p141 = scmp.ne.s32.totalorder %s126, %s140
    %p142 = scmp.eq.s32.totalorder %s18, 0
    %p143 = por %p141, %p142
    %s145 = sadd.s32 %s144, 1
    %p148 = scmp.eq.s32.totalorder %s12, 3
    %p149 = scmp.ne.s32.totalorder %s144, %s146
    %p150 = scmp.eq.s32.totalorder %s12, 0
    %p151 = por %p149, %p150
    %p152 = scmp.ne.s32.totalorder %s144, %s146
    %p153 = scmp.eq.s32.totalorder %s17, 3
    %p154 = por %p152, %p153
    %p155 = scmp.ne.s32.totalorder %s146, %s147
    %p156 = scmp.eq.s32.totalorder %s17, 0
    %p157 = por %p155, %p156
    %p158 = scmp.ne.s32.totalorder %s146, %s147
    %p159 = scmp.eq.s32.totalorder %s18, 3
    %p160 = por %p158, %p159
    %p162 = scmp.ne.s32.totalorder %s147, %s161
    %p163 = scmp.eq.s32.totalorder %s18, 0
    %p164 = por %p162, %p163
    %s165 = ssub.s32 %s19, %s31
    %s166 = ssub.s32 %s20, %s27
    %s167 = sor.u32 %s165, %s166
    %p168 = scmp.eq.s32.totalorder %s167, 0
    %s170 = sadd.s32 %s169, 1
    %s171 = scalar_select %p168, %s169, %s170
    %p174 = pneg %p168
    %p175 = scmp.eq.s32.totalorder %s12, 3
    %p176 = por %p174, %p175
    %p177 = scmp.ne.s32.totalorder %s169, %s172
    %p178 = scmp.eq.s32.totalorder %s12, 0
    %p179 = por %p177, %p178
    %p180 = scmp.ne.s32.totalorder %s169, %s172
    %p181 = scmp.eq.s32.totalorder %s17, 3
    %p182 = por %p180, %p181
    %p183 = scmp.ne.s32.totalorder %s172, %s173
    %p184 = scmp.eq.s32.totalorder %s17, 0
    %p185 = por %p183, %p184
    %p186 = scmp.ne.s32.totalorder %s172, %s173
    %p187 = scmp.eq.s32.totalorder %s18, 3
    %p188 = por %p186, %p187
    %p190 = scmp.ne.s32.totalorder %s173, %s189
    %p191 = scmp.eq.s32.totalorder %s18, 0
    %p192 = por %p190, %p191
    %p193 = scmp.le.s32.totalorder 1, %s12
    %p194 = scmp.lt.s32.totalorder %s12, 5
    %p195 = pnand %p193, %p194
    %p196 = pneg %p195
    // Predicated region
    $region9: #{cosmos_conv_projection_3d.1} parent=5 // pred_check
      _
    $region10: #{cosmos_conv_projection_3d.1} parent=5 // pred_check_branch
      %198 = sbr.rel (%p195) target = $region12
    $region11: #{cosmos_conv_projection_3d.1} parent=5 // pred_region
      %s199 = ssub.s32 %s12, 1
      // Predicated region
      $region13: #{cosmos_conv_projection_3d.1} parent=11 // pred_check
        %p200 = pneg %p73
      $region14: #{cosmos_conv_projection_3d.1} parent=11 // pred_check_branch
        %202 = sbr.rel (%p200) target = $region16
      $region15: #{cosmos_conv_projection_3d.1} parent=11 // pred_region
        _
      $region16: #{cosmos_conv_projection_3d.1} parent=11 // pred_fallthru
        _
      // Predicated region
      $region17: #{cosmos_conv_projection_3d.1} parent=11 // pred_check
        %p203 = pneg %p94
      $region18: #{cosmos_conv_projection_3d.1} parent=11 // pred_check_branch
        %205 = sbr.rel (%p203) target = $region20
      $region19: #{cosmos_conv_projection_3d.1} parent=11 // pred_region
        _
      $region20: #{cosmos_conv_projection_3d.1} parent=11 // pred_fallthru
        _
      // Predicated region
      $region21: #{cosmos_conv_projection_3d.1} parent=11 // pred_check
        %p206 = pneg %p115
      $region22: #{cosmos_conv_projection_3d.1} parent=11 // pred_check_branch
        %208 = sbr.rel (%p206) target = $region24
      $region23: #{cosmos_conv_projection_3d.1} parent=11 // pred_region
        _
      $region24: #{cosmos_conv_projection_3d.1} parent=11 // pred_fallthru
        _
      // Predicated region
      $region25: #{cosmos_conv_projection_3d.1} parent=11 // pred_check
        %p209 = pneg %p136
      $region26: #{cosmos_conv_projection_3d.1} parent=11 // pred_check_branch
        %211 = sbr.rel (%p209) target = $region28
      $region27: #{cosmos_conv_projection_3d.1} parent=11 // pred_region
        _
      $region28: #{cosmos_conv_projection_3d.1} parent=11 // pred_fallthru
        _
      // Predicated region
      $region29: #{cosmos_conv_projection_3d.1} parent=11 // pred_check
        %p212 = pneg %p157
      $region30: #{cosmos_conv_projection_3d.1} parent=11 // pred_check_branch
        %214 = sbr.rel (%p212) target = $region32
      $region31: #{cosmos_conv_projection_3d.1} parent=11 // pred_region
        _
      $region32: #{cosmos_conv_projection_3d.1} parent=11 // pred_fallthru
        _
    $region12: #{cosmos_conv_projection_3d.1} parent=5 // pred_fallthru
      _
    %p215 = scmp.lt.s32.totalorder %s12, 4
    // Predicated region
    $region33: #{cosmos_conv_projection_3d.1} parent=5 // pred_check
      %p216 = pneg %p215
    $region34: #{cosmos_conv_projection_3d.1} parent=5 // pred_check_branch
      %218 = sbr.rel (%p216) target = $region36
    $region35: #{cosmos_conv_projection_3d.1} parent=5 // pred_region
      // Predicated region
      $region37: #{cosmos_conv_projection_3d.1} parent=35 // pred_check
        %p219 = pneg %p46
      $region38: #{cosmos_conv_projection_3d.1} parent=35 // pred_check_branch
        %221 = sbr.rel (%p219) target = $region40
      $region39: #{cosmos_conv_projection_3d.1} parent=35 // pred_region
        %s222 = smul.u32 4, %s20
        %p223 = scmp.lt.s32.totalorder %s19, 1
        %s224 = scalar_select %p223, %s19, 1
        %p225 = scmp.lt.s32.totalorder %s222, 7
        %s226 = scalar_select %p225, %s222, 7
        %s227 = smul.addr %s226, 2
        %s228 = smul.addr %s224, 16
        %s229 = sadd.s32 %s227, %s228
        %s230 = smul.addr %s229, 4
        %s231 = scalar_lea.vmem %s0, %s230
        %s232 = smul.u32 4, %s20
      $region40: #{cosmos_conv_projection_3d.1} parent=35 // pred_fallthru
        _
    $region36: #{cosmos_conv_projection_3d.1} parent=5 // pred_fallthru
      _
    %p233 = scmp.le.s32.totalorder 1, %s12
    %p234 = scmp.lt.s32.totalorder %s12, 5
    %p235 = pnand %p233, %p234
    %p236 = pneg %p235
    // Predicated region
    $region41: #{cosmos_conv_projection_3d.1} parent=5 // pred_check
      _
    $region42: #{cosmos_conv_projection_3d.1} parent=5 // pred_check_branch
      %238 = sbr.rel (%p235) target = $region44
    $region43: #{cosmos_conv_projection_3d.1} parent=5 // pred_region
      %s239 = ssub.s32 %s12, 1
      %s240 = smul.u32 4, %s22
      %p241 = scmp.lt.s32.totalorder %s21, 1
      %s242 = scalar_select %p241, %s21, 1
      %p243 = scmp.lt.s32.totalorder %s240, 7
      %s244 = scalar_select %p243, %s240, 7
      %s245 = smul.addr %s244, 2
      %s246 = smul.addr %s242, 16
      %s247 = sadd.s32 %s245, %s246
      %s248 = smul.addr %s247, 4
      %s249 = scalar_lea.vmem %s0, %s248
      %p250 = pneg %p52
      %p251 = pneg %p49
      %p252 = pneg %p73
      %p253 = pneg %p70
      %p254 = pneg %p94
      %p255 = pneg %p91
      %p256 = pneg %p115
      %p257 = pneg %p112
      %p258 = pneg %p136
      %p259 = pneg %p133
      %p260 = pneg %p157
      %p261 = pneg %p154
      %p262 = pneg %p185
      %p263 = pneg %p182
      %s264 = smul.u32 4, %s22
      %p265 = scmp.lt.s32.totalorder %s21, 1
      %s266 = scalar_select %p265, %s21, 1
      %p267 = scmp.lt.s32.totalorder %s264, 7
      %s268 = scalar_select %p267, %s264, 7
      %s269 = smul.addr %s268, 4
      %s270 = smul.addr %s266, 32
      %s271 = sadd.s32 %s269, %s270
      %s272 = smul.addr %s271, 8
      %s273 = scalar_lea.vmem %s6, %s272
      %s274 = smul.u32 4, %s22
      %p275 = scmp.lt.s32.totalorder %s21, 1
      %s276 = scalar_select %p275, %s21, 1
      %p277 = scmp.lt.s32.totalorder %s274, 7
      %s278 = scalar_select %p277, %s274, 7
      %s279 = smul.addr %s278, 2
      %s280 = smul.addr %s276, 16
      %s281 = sadd.s32 %s279, %s280
      %s282 = smul.addr %s281, 4
      %s283 = scalar_lea.vmem %s0, %s282
      %s284 = smul.u32 4, %s22
      %s285 = smul.u32 4, %s22
      %p286 = scmp.lt.s32.totalorder %s21, 1
      %s287 = scalar_select %p286, %s21, 1
      %p288 = scmp.lt.s32.totalorder %s285, 7
      %s289 = scalar_select %p288, %s285, 7
      %s290 = smul.addr %s289, 4
      %s291 = smul.addr %s287, 32
      %s292 = sadd.s32 %s290, %s291
      %s293 = smul.addr %s292, 8
      %s294 = scalar_lea.vmem %s6, %s293
      %s295 = smul.u32 4, %s22
      %p296 = scmp.eq.s32.totalorder %s22, 0
      // Predicated region
      $region45: #{cosmos_conv_projection_3d.1} parent=43 // pred_check
        %p297 = pneg %p296
      $region46: #{cosmos_conv_projection_3d.1} parent=43 // pred_check_branch
        %299 = sbr.rel (%p297) target = $region48
      $region47: #{cosmos_conv_projection_3d.1} parent=43 // pred_region
        %300 = vst [vmem:[#allocation2] sm:$0xff] 0.0
        %vm301 = vcmask 273408
        %302 = vst.msk [vmem:[#allocation2 + $0x8] sm:$0xf] %vm301, 0.0
        %303 = vst [vmem:[#allocation4] sm:$0xff] 0.0
        %304 = vst [vmem:[#allocation4 + $0x8] sm:$0xff] 0.0
        %305 = vst [vmem:[#allocation4 + $0x10] sm:$0xff] 0.0
        %306 = vst [vmem:[#allocation4 + $0x18] sm:$0xff] 0.0
        %307 = vst [vmem:[#allocation4 + $0x20] sm:$0xff] 0.0
        %308 = vst [vmem:[#allocation4 + $0x28] sm:$0xff] 0.0
        %309 = vst [vmem:[#allocation4 + $0x30] sm:$0xff] 0.0
        %310 = vst [vmem:[#allocation4 + $0x38] sm:$0xff] 0.0
        %311 = vst [vmem:[#allocation4 + $0x40] sm:$0xff] 0.0
        %312 = vst [vmem:[#allocation4 + $0x48] sm:$0xff] 0.0
        %313 = vst [vmem:[#allocation4 + $0x50] sm:$0xff] 0.0
        %314 = vst [vmem:[#allocation4 + $0x58] sm:$0xff] 0.0
      $region48: #{cosmos_conv_projection_3d.1} parent=43 // pred_fallthru
        _
      %v315 = vld [vmem:[%s1] sm:$0xff]
      %v316 = vld [vmem:[%s1 + $0x8] sm:$0xff]
      %v317 = vld [vmem:[%s2] sm:$0xff]
      %v318 = vld [vmem:[%s2 + $0x8] sm:$0xff]
      %v319 = vld [vmem:[%s4] sm:$0xff]
      %v320 = vld [vmem:[%s4 + $0x8] sm:$0xff]
      %v321 = vld [vmem:[%s5] ss:$2 sm:$0x3]
      %s322 = scalar_lea.vmem %s5, 1
      %v323 = vld [vmem:[%s322] ss:$2 sm:$0x3]
      %s324 = smul.u32 %s22, 4
      %v325 = vld [vmem:[%s283] sm:$0xff]
      %327 = vrot.lane.b32.xlu0 %v325, 17
      %v328 = vpop.permute.xlu0 %327
      %v329 = vrot.slane %v328, 4
      %vm330 = vcmask 138240
      %v331 = vsel %vm330, %v329, %v328
      %vm334 = vcmask 1043592
      %vm335 = vcmask 1047556
      %vm336 = vmor %vm335, %vm334
      %337 = vst.msk [vmem:[#allocation2] sm:$0xff] %vm336, %v331
      %vm338 = vcmask 134144
      %339 = vst.msk [vmem:[#allocation2 + $0x8] sm:$0xf] %vm338, %v329
      %v340 = vld [vmem:[#allocation2] sm:$0xff]
      %v342 = vperm.slane %v321, 0
      %v343 = vperm.slane %v321, 1
      %v344 = vrot.slane %v343, 4
      %vm345 = vcmask 1043456
      %v346 = vsel %vm345, %v342, %v344
      %v348 = vmul.f32 %v340, %v346
      %350 = vst [vmem:[#allocation1] ss:$2 sm:$0xff] %v348
      %v351 = vld.sshfl [vmem:[#allocation1] sm:$0xff pattern:$0x75316420]
      %v352 = vld.sshfl [vmem:[#allocation1 + $0x8] sm:$0xff pattern:$0x75316420]
      %355 = vst [vmem:[#allocation3] sm:$0xf] %v351
      %356 = vst [vmem:[#allocation3 + $0x8] sm:$0xf] %v352
      %v357 = vld [vmem:[#allocation2] sm:$0xff]
      %v358 = vld [vmem:[#allocation2 + $0x8] sm:$0xf]
      %s361 = scalar_lea.vmem [#allocation1], 1
      %362 = vst [vmem:[%s361] ss:$2 sm:$0xff] %v357
      %s363 = scalar_lea.vmem [#allocation1], 17
      %364 = vst [vmem:[%s363] ss:$2 sm:$0xff] %v358
      %v365 = vld.sshfl [vmem:[#allocation1] sm:$0xff pattern:$0x75316420]
      %v366 = vld.sshfl [vmem:[#allocation1 + $0x8] sm:$0xff pattern:$0x75316420]
      %v367 = vld.sshfl [vmem:[#allocation1 + $0x10] sm:$0xff pattern:$0x75316420]
      %368 = vrot.lane.b32.xlu0 %v365, 127
      %v369 = vpop.permute.xlu0 %368
      %370 = vrot.lane.b32.xlu0 %v366, 127
      %v371 = vpop.permute.xlu0 %370
      %372 = vrot.lane.b32.xlu0 %v367, 127
      %v373 = vpop.permute.xlu0 %372
      %vm374 = vcmask 1039360
      %v375 = vsel %vm374, %v369, %v371
      %v376 = vsel %vm374, %v371, %v373
      %379 = vst [vmem:[#allocation3] sm:$0xf0] %v375
      %380 = vst [vmem:[#allocation3 + $0x8] sm:$0xf0] %v376
      %v381 = vld [vmem:[#allocation2] sm:$0xff]
      %v382 = vld [vmem:[#allocation2 + $0x8] sm:$0xf]
      %v384 = vperm.slane %v323, 0
      %v385 = vperm.slane %v323, 1
      %v386 = vrot.slane %v385, 4
      %v387 = vsel %vm345, %v384, %v386
      %388 = vrot.lane.b32.xlu0 %v387, 2
      %v389 = vpop.permute.xlu0 %388
      %v390 = vrot.slane %v389, 4
      %vm391 = vcmask 15360
      %v392 = vsel %vm391, %v390, %v389
      %v395 = vmul.f32 %v381, %v392
      %v396 = vmul.f32 %v382, %v390
      %399 = vst [vmem:[#allocation1] ss:$2 sm:$0xff] %v395
      %s400 = scalar_lea.vmem [#allocation1], 16
      %401 = vst [vmem:[%s400] ss:$2 sm:$0xff] %v396
      %v402 = vld.sshfl [vmem:[#allocation1] sm:$0xff pattern:$0x75316420]
      %v403 = vld.sshfl [vmem:[#allocation1 + $0x8] sm:$0xff pattern:$0x75316420]
      %v404 = vld.sshfl [vmem:[#allocation1 + $0x10] sm:$0xff pattern:$0x75316420]
      %405 = vrot.lane.b32.xlu0 %v402, 126
      %v406 = vpop.permute.xlu0 %405
      %407 = vrot.lane.b32.xlu0 %v403, 126
      %v408 = vpop.permute.xlu0 %407
      %409 = vrot.lane.b32.xlu0 %v404, 126
      %v410 = vpop.permute.xlu0 %409
      %vm411 = vcmask 1031168
      %v412 = vsel %vm411, %v406, %v408
      %v413 = vsel %vm411, %v408, %v410
      %416 = vst [vmem:[#allocation3 + $0x10] sm:$0xf] %v412
      %417 = vst [vmem:[#allocation3 + $0x18] sm:$0xf] %v413
      %v418 = vld [vmem:[#allocation2] sm:$0xff]
      %v419 = vld [vmem:[#allocation2 + $0x8] sm:$0xf]
      %420 = vrot.lane.b32.xlu0 %v346, 16
      %v421 = vpop.permute.xlu0 %420
      %v422 = vrot.slane %v421, 4
      %vm423 = vcmask 130048
      %v424 = vsel %vm423, %v422, %v421
      %v427 = vmul.f32 %v418, %v424
      %v428 = vmul.f32 %v419, %v422
      %s431 = scalar_lea.vmem [#allocation1], 1
      %432 = vst [vmem:[%s431] ss:$2 sm:$0xff] %v427
      %s433 = scalar_lea.vmem [#allocation1], 17
      %434 = vst [vmem:[%s433] ss:$2 sm:$0xff] %v428
      %v435 = vld.sshfl [vmem:[#allocation1] sm:$0xff pattern:$0x75316420]
      %v436 = vld.sshfl [vmem:[#allocation1 + $0x8] sm:$0xff pattern:$0x75316420]
      %v437 = vld.sshfl [vmem:[#allocation1 + $0x10] sm:$0xff pattern:$0x75316420]
      %438 = vrot.lane.b32.xlu0 %v435, 112
      %v439 = vpop.permute.xlu0 %438
      %440 = vrot.lane.b32.xlu0 %v436, 112
      %v441 = vpop.permute.xlu0 %440
      %442 = vrot.lane.b32.xlu0 %v437, 112
      %v443 = vpop.permute.xlu0 %442
      %vm444 = vcmask 916480
      %v445 = vsel %vm444, %v439, %v441
      %v446 = vsel %vm444, %v441, %v443
      %449 = vst [vmem:[#allocation3 + $0x10] sm:$0xf0] %v445
      %450 = vst [vmem:[#allocation3 + $0x18] sm:$0xf0] %v446
      %v451 = vld [vmem:[#allocation2] sm:$0xff]
      %v452 = vld [vmem:[#allocation2 + $0x8] sm:$0xf]
      %455 = vst [vmem:[#allocation1] ss:$2 sm:$0xff] %v451
      %s456 = scalar_lea.vmem [#allocation1], 16
      %457 = vst [vmem:[%s456] ss:$2 sm:$0xff] %v452
      %v458 = vld.sshfl [vmem:[#allocation1] sm:$0xff pattern:$0x75316420]
      %v459 = vld.sshfl [vmem:[#allocation1 + $0x8] sm:$0xff pattern:$0x75316420]
      %v460 = vld.sshfl [vmem:[#allocation1 + $0x10] sm:$0xff pattern:$0x75316420]
      %461 = vrot.lane.b32.xlu0 %v458, 111
      %v462 = vpop.permute.xlu0 %461
      %463 = vrot.lane.b32.xlu0 %v459, 111
      %v464 = vpop.permute.xlu0 %463
      %465 = vrot.lane.b32.xlu0 %v460, 111
      %v466 = vpop.permute.xlu0 %465
      %vm467 = vcmask 908288
      %v468 = vsel %vm467, %v462, %v464
      %v469 = vsel %vm467, %v464, %v466
      %472 = vst [vmem:[#allocation3 + $0x20] sm:$0xf] %v468
      %473 = vst [vmem:[#allocation3 + $0x28] sm:$0xf] %v469
      %v474 = vld [vmem:[#allocation2] sm:$0xff]
      %v475 = vld [vmem:[#allocation2 + $0x8] sm:$0xf]
      %476 = vrot.lane.b32.xlu0 %v387, 18
      %v477 = vpop.permute.xlu0 %476
      %v478 = vrot.slane %v477, 4
      %vm479 = vcmask 146432
      %v480 = vsel %vm479, %v478, %v477
      %v483 = vmul.f32 %v474, %v480
      %v484 = vmul.f32 %v475, %v478
      %s487 = scalar_lea.vmem [#allocation1], 1
      %488 = vst [vmem:[%s487] ss:$2 sm:$0xff] %v483
      %s489 = scalar_lea.vmem [#allocation1], 17
      %490 = vst [vmem:[%s489] ss:$2 sm:$0xff] %v484
      %v491 = vld.sshfl [vmem:[#allocation1] sm:$0xff pattern:$0x75316420]
      %v492 = vld.sshfl [vmem:[#allocation1 + $0x8] sm:$0xff pattern:$0x75316420]
      %v493 = vld.sshfl [vmem:[#allocation1 + $0x10] sm:$0xff pattern:$0x75316420]
      %494 = vrot.lane.b32.xlu0 %v491, 110
      %v495 = vpop.permute.xlu0 %494
      %496 = vrot.lane.b32.xlu0 %v492, 110
      %v497 = vpop.permute.xlu0 %496
      %498 = vrot.lane.b32.xlu0 %v493, 110
      %v499 = vpop.permute.xlu0 %498
      %vm500 = vcmask 900096
      %v501 = vsel %vm500, %v495, %v497
      %v502 = vsel %vm500, %v497, %v499
      %505 = vst [vmem:[#allocation3 + $0x20] sm:$0xf0] %v501
      %506 = vst [vmem:[#allocation3 + $0x28] sm:$0xf0] %v502
      %v507 = vld [vmem:[#allocation2] sm:$0xff]
      %v508 = vld [vmem:[#allocation2 + $0x8] sm:$0xf]
      %509 = vrot.lane.b32.xlu0 %v346, 32
      %v510 = vpop.permute.xlu0 %509
      %v511 = vrot.slane %v510, 4
      %vm512 = vcmask 261120
      %v513 = vsel %vm512, %v511, %v510
      %v516 = vmul.f32 %v507, %v513
      %v517 = vmul.f32 %v508, %v511
      %520 = vst [vmem:[#allocation1] ss:$2 sm:$0xff] %v516
      %s521 = scalar_lea.vmem [#allocation1], 16
      %522 = vst [vmem:[%s521] ss:$2 sm:$0xff] %v517
      %v523 = vld.sshfl [vmem:[#allocation1] sm:$0xff pattern:$0x75316420]
      %v524 = vld.sshfl [vmem:[#allocation1 + $0x8] sm:$0xff pattern:$0x75316420]
      %v525 = vld.sshfl [vmem:[#allocation1 + $0x10] sm:$0xff pattern:$0x75316420]
      %526 = vrot.lane.b32.xlu0 %v523, 96
      %v527 = vpop.permute.xlu0 %526
      %528 = vrot.lane.b32.xlu0 %v524, 96
      %v529 = vpop.permute.xlu0 %528
      %530 = vrot.lane.b32.xlu0 %v525, 96
      %v531 = vpop.permute.xlu0 %530
      %vm532 = vcmask 785408
      %v533 = vsel %vm532, %v527, %v529
      %v534 = vsel %vm532, %v529, %v531
      %537 = vst [vmem:[#allocation3 + $0x30] sm:$0xf] %v533
      %538 = vst [vmem:[#allocation3 + $0x38] sm:$0xf] %v534
      %v539 = vld [vmem:[#allocation2] sm:$0xff]
      %v540 = vld [vmem:[#allocation2 + $0x8] sm:$0xf]
      %s543 = scalar_lea.vmem [#allocation1], 1
      %544 = vst [vmem:[%s543] ss:$2 sm:$0xff] %v539
      %s545 = scalar_lea.vmem [#allocation1], 17
      %546 = vst [vmem:[%s545] ss:$2 sm:$0xff] %v540
      %v547 = vld.sshfl [vmem:[#allocation1] sm:$0xff pattern:$0x75316420]
      %v548 = vld.sshfl [vmem:[#allocation1 + $0x8] sm:$0xff pattern:$0x75316420]
      %v549 = vld.sshfl [vmem:[#allocation1 + $0x10] sm:$0xff pattern:$0x75316420]
      %550 = vrot.lane.b32.xlu0 %v547, 95
      %v551 = vpop.permute.xlu0 %550
      %552 = vrot.lane.b32.xlu0 %v548, 95
      %v553 = vpop.permute.xlu0 %552
      %554 = vrot.lane.b32.xlu0 %v549, 95
      %v555 = vpop.permute.xlu0 %554
      %vm556 = vcmask 777216
      %v557 = vsel %vm556, %v551, %v553
      %v558 = vsel %vm556, %v553, %v555
      %561 = vst [vmem:[#allocation3 + $0x30] sm:$0xf0] %v557
      %562 = vst [vmem:[#allocation3 + $0x38] sm:$0xf0] %v558
      %v563 = vld [vmem:[#allocation2] sm:$0xff]
      %v564 = vld [vmem:[#allocation2 + $0x8] sm:$0xf]
      %565 = vrot.lane.b32.xlu0 %v387, 34
      %v566 = vpop.permute.xlu0 %565
      %v567 = vrot.slane %v566, 4
      %vm568 = vcmask 277504
      %v569 = vsel %vm568, %v567, %v566
      %v572 = vmul.f32 %v563, %v569
      %v573 = vmul.f32 %v564, %v567
      %576 = vst [vmem:[#allocation1] ss:$2 sm:$0xff] %v572
      %s577 = scalar_lea.vmem [#allocation1], 16
      %578 = vst [vmem:[%s577] ss:$2 sm:$0xff] %v573
      %v579 = vld.sshfl [vmem:[#allocation1] sm:$0xff pattern:$0x75316420]
      %v580 = vld.sshfl [vmem:[#allocation1 + $0x8] sm:$0xff pattern:$0x75316420]
      %v581 = vld.sshfl [vmem:[#allocation1 + $0x10] sm:$0xff pattern:$0x75316420]
      %582 = vrot.lane.b32.xlu0 %v579, 94
      %v583 = vpop.permute.xlu0 %582
      %584 = vrot.lane.b32.xlu0 %v580, 94
      %v585 = vpop.permute.xlu0 %584
      %586 = vrot.lane.b32.xlu0 %v581, 94
      %v587 = vpop.permute.xlu0 %586
      %vm588 = vcmask 769024
      %v589 = vsel %vm588, %v583, %v585
      %v590 = vsel %vm588, %v585, %v587
      %593 = vst [vmem:[#allocation3 + $0x40] sm:$0xf] %v589
      %594 = vst [vmem:[#allocation3 + $0x48] sm:$0xf] %v590
      %v595 = vld [vmem:[#allocation3] sm:$0xff]
      %v596 = vld [vmem:[#allocation3 + $0x8] sm:$0xff]
      %v597 = vld [vmem:[#allocation3 + $0x10] sm:$0xff]
      %v598 = vld [vmem:[#allocation3 + $0x18] sm:$0xff]
      %v599 = vld [vmem:[#allocation3 + $0x20] sm:$0xff]
      %v600 = vld [vmem:[#allocation3 + $0x28] sm:$0xff]
      %v601 = vld [vmem:[#allocation3 + $0x30] sm:$0xff]
      %v602 = vld [vmem:[#allocation3 + $0x38] sm:$0xff]
      %v603 = vld [vmem:[#allocation3 + $0x40] sm:$0xf]
      %v604 = vld [vmem:[#allocation3 + $0x48] sm:$0xf]
      %606 = vset.pattern.permute.xlu0 0
      %607 = vperm.xlu0 %606, %v317
      %v608 = vpop.permute.xlu0 %607
      %611 = vset.pattern.permute.xlu0 0
      %612 = vperm.xlu0 %611, %v318
      %v613 = vpop.permute.xlu0 %612
      %vm615 = vcmask 293888
      %v617 = vsel %vm615, %v315, 0
      %v620 = vsel %vm615, %v316, 0
      %v623 = vsel %vm345, %v603, 0
      %v626 = vsel %vm345, %v604, 0
      %628 = vmatpush.msra.mxu0 0.0
      %629 = vmatpush.msra.mxu0 0.0
      %630 = vmatpush.msra.mxu0 0.0
      %631 = vmatpush.msra.mxu0 0.0
      %632 = vmatpush.msra.mxu0 0.0
      %633 = vmatpush.msra.mxu0 0.0
      %634 = vmatpush.msra.mxu0 0.0
      %635 = vmatpush.msra.mxu0 0.0
      %636 = vmatpush.msra.mxu0 0.0
      %637 = vmatpush.msra.mxu0 0.0
      %638 = vmatpush.msra.mxu0 0.0
      %639 = vmatpush.msra.mxu0 %v623
      %640 = vmatpush.msra.mxu0 %v601
      %641 = vmatpush.msra.mxu0 %v599
      %642 = vmatpush.msra.mxu0 %v597
      %643 = vmatpush.msra.mxu0 %v595
      %644 = vmatmul.f32.gmra.mxu0 %v617
      %v645 = vpop.f32.mrf.mxu0
      %v646 = vadd.f32 %v608, %v645
      %647 = vmatmul.f32.gmra.mxu0 %v620
      %v648 = vpop.f32.mrf.mxu0
      %v649 = vadd.f32 %v613, %v648
      %650 = vdwg.mxu0
      %651 = vmatpush.msra.mxu0 0.0
      %652 = vmatpush.msra.mxu0 0.0
      %653 = vmatpush.msra.mxu0 0.0
      %654 = vmatpush.msra.mxu0 0.0
      %655 = vmatpush.msra.mxu0 0.0
      %656 = vmatpush.msra.mxu0 0.0
      %657 = vmatpush.msra.mxu0 0.0
      %658 = vmatpush.msra.mxu0 0.0
      %659 = vmatpush.msra.mxu0 0.0
      %660 = vmatpush.msra.mxu0 0.0
      %661 = vmatpush.msra.mxu0 0.0
      %662 = vmatpush.msra.mxu0 %v626
      %663 = vmatpush.msra.mxu0 %v602
      %664 = vmatpush.msra.mxu0 %v600
      %665 = vmatpush.msra.mxu0 %v598
      %666 = vmatpush.msra.mxu0 %v596
      %667 = vmatmul.f32.gmra.mxu0 %v617
      %v668 = vpop.f32.mrf.mxu0
      %v669 = vadd.f32 %v608, %v668
      %670 = vmatmul.f32.gmra.mxu0 %v620
      %v671 = vpop.f32.mrf.mxu0
      %v672 = vadd.f32 %v613, %v671
      %673 = vdwg.mxu0
      %p674 = scmp.lt.s32.totalorder %s324, 0
      %s675 = ssub.s32 0, %s324
      %s676 = scalar_select %p674, %s675, %s324
      %s677 = sdiv.u32.pop %s676, 3
      %s678 = srem.u32.pop %s676, 3
      %s679 = ssub.s32 0, %s678
      %s680 = scalar_select %p674, %s679, %s678
      %p681 = scmp.ne.s32.totalorder %s680, 0
      %p682 = scmp.lt.s32.totalorder %s680, 0
      %p683 = pnand %p682, %p681
      %p684 = pneg %p683
      %s685 = sadd.s32 %s680, 3
      %s686 = scalar_select %p684, %s685, %s680
      %s687 = smul.u32 %s686, 16
      %s688 = sshra.s32 %s687, 3
      %s689 = sand.u32 %s687, 7
      %s690 = smul.u32 %s688, 2
      %s691 = smul.addr %s690, 8
      %s692 = scalar_lea.vmem [#allocation4], %s691
      %693 = vst [vmem:[%s692] sm:$0xff] %v646
      %694 = vst [vmem:[%s692 + $0x8] sm:$0xff] %v669
      %695 = vst [vmem:[%s692 + $0x10] sm:$0xff] %v649
      %696 = vst [vmem:[%s692 + $0x18] sm:$0xff] %v672
      %p697 = scmp.eq.s32.totalorder %s324, 0
      %p698 = scmp.eq.s32.totalorder %s324, 1
      %s699 = sadd.s32 %s686, 2
      %s700 = scalar_select %p698, 1, %s699
      %s701 = scalar_select %p697, 0, %s700
      %s702 = smul.u32 %s701, 16
      %s703 = scalar_lea.vmem %s3, %s702
      %v704 = vld [vmem:[%s703] sm:$0xff]
      %v705 = vld [vmem:[%s703 + $0x8] sm:$0xff]
      %v706 = vld [vmem:[#allocation4] sm:$0xff]
      %v707 = vld [vmem:[#allocation4 + $0x8] sm:$0xff]
      %v708 = vld [vmem:[#allocation4 + $0x10] sm:$0xff]
      %v709 = vld [vmem:[#allocation4 + $0x18] sm:$0xff]
      %v710 = vld [vmem:[#allocation4 + $0x20] sm:$0xff]
      %v711 = vld [vmem:[#allocation4 + $0x28] sm:$0xff]
      %v712 = vld [vmem:[#allocation4 + $0x30] sm:$0xff]
      %v713 = vld [vmem:[#allocation4 + $0x38] sm:$0xff]
      %v714 = vld [vmem:[#allocation4 + $0x40] sm:$0xff]
      %v715 = vld [vmem:[#allocation4 + $0x48] sm:$0xff]
      %v716 = vld [vmem:[#allocation4 + $0x50] sm:$0xff]
      %v717 = vld [vmem:[#allocation4 + $0x58] sm:$0xff]
      %719 = vset.pattern.permute.xlu0 0
      %720 = vperm.xlu0 %719, %v319
      %v721 = vpop.permute.xlu0 %720
      %724 = vset.pattern.permute.xlu0 0
      %725 = vperm.xlu0 %724, %v320
      %v726 = vpop.permute.xlu0 %725
      %vm728 = vcmask 392192
      %v730 = vsel %vm728, %v704, 0
      %v733 = vsel %vm728, %v705, 0
      %735 = vmatpush.msra.mxu0 0.0
      %736 = vmatpush.msra.mxu0 0.0
      %737 = vmatpush.msra.mxu0 0.0
      %738 = vmatpush.msra.mxu0 0.0
      %739 = vmatpush.msra.mxu0 0.0
      %740 = vmatpush.msra.mxu0 0.0
      %741 = vmatpush.msra.mxu0 0.0
      %742 = vmatpush.msra.mxu0 0.0
      %743 = vmatpush.msra.mxu0 0.0
      %744 = vmatpush.msra.mxu0 0.0
      %745 = vmatpush.msra.mxu0 %v716
      %746 = vmatpush.msra.mxu0 %v714
      %747 = vmatpush.msra.mxu0 %v712
      %748 = vmatpush.msra.mxu0 %v710
      %749 = vmatpush.msra.mxu0 %v708
      %750 = vmatpush.msra.mxu0 %v706
      %751 = vmatmul.f32.gmra.mxu0 %v730
      %v752 = vpop.f32.mrf.mxu0
      %v753 = vadd.f32 %v721, %v752
      %754 = vmatmul.f32.gmra.mxu0 %v733
      %v755 = vpop.f32.mrf.mxu0
      %v756 = vadd.f32 %v726, %v755
      %757 = vdwg.mxu0
      %758 = vmatpush.msra.mxu0 0.0
      %759 = vmatpush.msra.mxu0 0.0
      %760 = vmatpush.msra.mxu0 0.0
      %761 = vmatpush.msra.mxu0 0.0
      %762 = vmatpush.msra.mxu0 0.0
      %763 = vmatpush.msra.mxu0 0.0
      %764 = vmatpush.msra.mxu0 0.0
      %765 = vmatpush.msra.mxu0 0.0
      %766 = vmatpush.msra.mxu0 0.0
      %767 = vmatpush.msra.mxu0 0.0
      %768 = vmatpush.msra.mxu0 %v717
      %769 = vmatpush.msra.mxu0 %v715
      %770 = vmatpush.msra.mxu0 %v713
      %771 = vmatpush.msra.mxu0 %v711
      %772 = vmatpush.msra.mxu0 %v709
      %773 = vmatpush.msra.mxu0 %v707
      %774 = vmatmul.f32.gmra.mxu0 %v730
      %v775 = vpop.f32.mrf.mxu0
      %v776 = vadd.f32 %v721, %v775
      %777 = vmatmul.f32.gmra.mxu0 %v733
      %v778 = vpop.f32.mrf.mxu0
      %v779 = vadd.f32 %v726, %v778
      %780 = vdwg.mxu0
      %781 = vst [vmem:[%s294] sm:$0xff] %v753
      %782 = vst [vmem:[%s294 + $0x8] sm:$0xff] %v776
      %783 = vst [vmem:[%s294 + $0x10] sm:$0xff] %v756
      %784 = vst [vmem:[%s294 + $0x18] sm:$0xff] %v779
      %s785 = sadd.s32 %s324, 1
      %s786 = scalar_lea.vmem %s283, 8
      %v787 = vld [vmem:[%s786] sm:$0xff]
      %789 = vrot.lane.b32.xlu0 %v787, 17
      %v790 = vpop.permute.xlu0 %789
      %v791 = vrot.slane %v790, 4
      %v792 = vsel %vm330, %v791, %v790
      %795 = vst.msk [vmem:[#allocation2] sm:$0xff] %vm336, %v792
      %796 = vst.msk [vmem:[#allocation2 + $0x8] sm:$0xf] %vm338, %v791
      %v797 = vld [vmem:[#allocation2] sm:$0xff]
      %v798 = vmul.f32 %v797, %v346
      %800 = vst [vmem:[#allocation1] ss:$2 sm:$0xff] %v798
      %v801 = vld.sshfl [vmem:[#allocation1] sm:$0xff pattern:$0x75316420]
      %v802 = vld.sshfl [vmem:[#allocation1 + $0x8] sm:$0xff pattern:$0x75316420]
      %805 = vst [vmem:[#allocation3] sm:$0xf] %v801
      %806 = vst [vmem:[#allocation3 + $0x8] sm:$0xf] %v802
      %v807 = vld [vmem:[#allocation2] sm:$0xff]
      %v808 = vld [vmem:[#allocation2 + $0x8] sm:$0xf]
      %s811 = scalar_lea.vmem [#allocation1], 1
      %812 = vst [vmem:[%s811] ss:$2 sm:$0xff] %v807
      %s813 = scalar_lea.vmem [#allocation1], 17
      %814 = vst [vmem:[%s813] ss:$2 sm:$0xff] %v808
      %v815 = vld.sshfl [vmem:[#allocation1] sm:$0xff pattern:$0x75316420]
      %v816 = vld.sshfl [vmem:[#allocation1 + $0x8] sm:$0xff pattern:$0x75316420]
      %v817 = vld.sshfl [vmem:[#allocation1 + $0x10] sm:$0xff pattern:$0x75316420]
      %818 = vrot.lane.b32.xlu0 %v815, 127
      %v819 = vpop.permute.xlu0 %818
      %820 = vrot.lane.b32.xlu0 %v816, 127
      %v821 = vpop.permute.xlu0 %820
      %822 = vrot.lane.b32.xlu0 %v817, 127
      %v823 = vpop.permute.xlu0 %822
      %v824 = vsel %vm374, %v819, %v821
      %v825 = vsel %vm374, %v821, %v823
      %828 = vst [vmem:[#allocation3] sm:$0xf0] %v824
      %829 = vst [vmem:[#allocation3 + $0x8] sm:$0xf0] %v825
      %v830 = vld [vmem:[#allocation2] sm:$0xff]
      %v831 = vld [vmem:[#allocation2 + $0x8] sm:$0xf]
      %v832 = vmul.f32 %v830, %v392
      %v833 = vmul.f32 %v831, %v390
      %836 = vst [vmem:[#allocation1] ss:$2 sm:$0xff] %v832
      %s837 = scalar_lea.vmem [#allocation1], 16
      %838 = vst [vmem:[%s837] ss:$2 sm:$0xff] %v833
      %v839 = vld.sshfl [vmem:[#allocation1] sm:$0xff pattern:$0x75316420]
      %v840 = vld.sshfl [vmem:[#allocation1 + $0x8] sm:$0xff pattern:$0x75316420]
      %v841 = vld.sshfl [vmem:[#allocation1 + $0x10] sm:$0xff pattern:$0x75316420]
      %842 = vrot.lane.b32.xlu0 %v839, 126
      %v843 = vpop.permute.xlu0 %842
      %844 = vrot.lane.b32.xlu0 %v840, 126
      %v845 = vpop.permute.xlu0 %844
      %846 = vrot.lane.b32.xlu0 %v841, 126
      %v847 = vpop.permute.xlu0 %846
      %v848 = vsel %vm411, %v843, %v845
      %v849 = vsel %vm411, %v845, %v847
      %852 = vst [vmem:[#allocation3 + $0x10] sm:$0xf] %v848
      %853 = vst [vmem:[#allocation3 + $0x18] sm:$0xf] %v849
      %v854 = vld [vmem:[#allocation2] sm:$0xff]
      %v855 = vld [vmem:[#allocation2 + $0x8] sm:$0xf]
      %v856 = vmul.f32 %v854, %v424
      %v857 = vmul.f32 %v855, %v422
      %s860 = scalar_lea.vmem [#allocation1], 1
      %861 = vst [vmem:[%s860] ss:$2 sm:$0xff] %v856
      %s862 = scalar_lea.vmem [#allocation1], 17
      %863 = vst [vmem:[%s862] ss:$2 sm:$0xff] %v857
      %v864 = vld.sshfl [vmem:[#allocation1] sm:$0xff pattern:$0x75316420]
      %v865 = vld.sshfl [vmem:[#allocation1 + $0x8] sm:$0xff pattern:$0x75316420]
      %v866 = vld.sshfl [vmem:[#allocation1 + $0x10] sm:$0xff pattern:$0x75316420]
      %867 = vrot.lane.b32.xlu0 %v864, 112
      %v868 = vpop.permute.xlu0 %867
      %869 = vrot.lane.b32.xlu0 %v865, 112
      %v870 = vpop.permute.xlu0 %869
      %871 = vrot.lane.b32.xlu0 %v866, 112
      %v872 = vpop.permute.xlu0 %871
      %v873 = vsel %vm444, %v868, %v870
      %v874 = vsel %vm444, %v870, %v872
      %877 = vst [vmem:[#allocation3 + $0x10] sm:$0xf0] %v873
      %878 = vst [vmem:[#allocation3 + $0x18] sm:$0xf0] %v874
      %v879 = vld [vmem:[#allocation2] sm:$0xff]
      %v880 = vld [vmem:[#allocation2 + $0x8] sm:$0xf]
      %883 = vst [vmem:[#allocation1] ss:$2 sm:$0xff] %v879
      %s884 = scalar_lea.vmem [#allocation1], 16
      %885 = vst [vmem:[%s884] ss:$2 sm:$0xff] %v880
      %v886 = vld.sshfl [vmem:[#allocation1] sm:$0xff pattern:$0x75316420]
      %v887 = vld.sshfl [vmem:[#allocation1 + $0x8] sm:$0xff pattern:$0x75316420]
      %v888 = vld.sshfl [vmem:[#allocation1 + $0x10] sm:$0xff pattern:$0x75316420]
      %889 = vrot.lane.b32.xlu0 %v886, 111
      %v890 = vpop.permute.xlu0 %889
      %891 = vrot.lane.b32.xlu0 %v887, 111
      %v892 = vpop.permute.xlu0 %891
      %893 = vrot.lane.b32.xlu0 %v888, 111
      %v894 = vpop.permute.xlu0 %893
      %v895 = vsel %vm467, %v890, %v892
      %v896 = vsel %vm467, %v892, %v894
      %899 = vst [vmem:[#allocation3 + $0x20] sm:$0xf] %v895
      %900 = vst [vmem:[#allocation3 + $0x28] sm:$0xf] %v896
      %v901 = vld [vmem:[#allocation2] sm:$0xff]
      %v902 = vld [vmem:[#allocation2 + $0x8] sm:$0xf]
      %v903 = vmul.f32 %v901, %v480
      %v904 = vmul.f32 %v902, %v478
      %s907 = scalar_lea.vmem [#allocation1], 1
      %908 = vst [vmem:[%s907] ss:$2 sm:$0xff] %v903
      %s909 = scalar_lea.vmem [#allocation1], 17
      %910 = vst [vmem:[%s909] ss:$2 sm:$0xff] %v904
      %v911 = vld.sshfl [vmem:[#allocation1] sm:$0xff pattern:$0x75316420]
      %v912 = vld.sshfl [vmem:[#allocation1 + $0x8] sm:$0xff pattern:$0x75316420]
      %v913 = vld.sshfl [vmem:[#allocation1 + $0x10] sm:$0xff pattern:$0x75316420]
      %914 = vrot.lane.b32.xlu0 %v911, 110
      %v915 = vpop.permute.xlu0 %914
      %916 = vrot.lane.b32.xlu0 %v912, 110
      %v917 = vpop.permute.xlu0 %916
      %918 = vrot.lane.b32.xlu0 %v913, 110
      %v919 = vpop.permute.xlu0 %918
      %v920 = vsel %vm500, %v915, %v917
      %v921 = vsel %vm500, %v917, %v919
      %924 = vst [vmem:[#allocation3 + $0x20] sm:$0xf0] %v920
      %925 = vst [vmem:[#allocation3 + $0x28] sm:$0xf0] %v921
      %v926 = vld [vmem:[#allocation2] sm:$0xff]
      %v927 = vld [vmem:[#allocation2 + $0x8] sm:$0xf]
      %v928 = vmul.f32 %v926, %v513
      %v929 = vmul.f32 %v927, %v511
      %932 = vst [vmem:[#allocation1] ss:$2 sm:$0xff] %v928
      %s933 = scalar_lea.vmem [#allocation1], 16
      %934 = vst [vmem:[%s933] ss:$2 sm:$0xff] %v929
      %v935 = vld.sshfl [vmem:[#allocation1] sm:$0xff pattern:$0x75316420]
      %v936 = vld.sshfl [vmem:[#allocation1 + $0x8] sm:$0xff pattern:$0x75316420]
      %v937 = vld.sshfl [vmem:[#allocation1 + $0x10] sm:$0xff pattern:$0x75316420]
      %938 = vrot.lane.b32.xlu0 %v935, 96
      %v939 = vpop.permute.xlu0 %938
      %940 = vrot.lane.b32.xlu0 %v936, 96
      %v941 = vpop.permute.xlu0 %940
      %942 = vrot.lane.b32.xlu0 %v937, 96
      %v943 = vpop.permute.xlu0 %942
      %v944 = vsel %vm532, %v939, %v941
      %v945 = vsel %vm532, %v941, %v943
      %948 = vst [vmem:[#allocation3 + $0x30] sm:$0xf] %v944
      %949 = vst [vmem:[#allocation3 + $0x38] sm:$0xf] %v945
      %v950 = vld [vmem:[#allocation2] sm:$0xff]
      %v951 = vld [vmem:[#allocation2 + $0x8] sm:$0xf]
      %s954 = scalar_lea.vmem [#allocation1], 1
      %955 = vst [vmem:[%s954] ss:$2 sm:$0xff] %v950
      %s956 = scalar_lea.vmem [#allocation1], 17
      %957 = vst [vmem:[%s956] ss:$2 sm:$0xff] %v951
      %v958 = vld.sshfl [vmem:[#allocation1] sm:$0xff pattern:$0x75316420]
      %v959 = vld.sshfl [vmem:[#allocation1 + $0x8] sm:$0xff pattern:$0x75316420]
      %v960 = vld.sshfl [vmem:[#allocation1 + $0x10] sm:$0xff pattern:$0x75316420]
      %961 = vrot.lane.b32.xlu0 %v958, 95
      %v962 = vpop.permute.xlu0 %961
      %963 = vrot.lane.b32.xlu0 %v959, 95
      %v964 = vpop.permute.xlu0 %963
      %965 = vrot.lane.b32.xlu0 %v960, 95
      %v966 = vpop.permute.xlu0 %965
      %v967 = vsel %vm556, %v962, %v964
      %v968 = vsel %vm556, %v964, %v966
      %971 = vst [vmem:[#allocation3 + $0x30] sm:$0xf0] %v967
      %972 = vst [vmem:[#allocation3 + $0x38] sm:$0xf0] %v968
      %v973 = vld [vmem:[#allocation2] sm:$0xff]
      %v974 = vld [vmem:[#allocation2 + $0x8] sm:$0xf]
      %v975 = vmul.f32 %v973, %v569
      %v976 = vmul.f32 %v974, %v567
      %979 = vst [vmem:[#allocation1] ss:$2 sm:$0xff] %v975
      %s980 = scalar_lea.vmem [#allocation1], 16
      %981 = vst [vmem:[%s980] ss:$2 sm:$0xff] %v976
      %v982 = vld.sshfl [vmem:[#allocation1] sm:$0xff pattern:$0x75316420]
      %v983 = vld.sshfl [vmem:[#allocation1 + $0x8] sm:$0xff pattern:$0x75316420]
      %v984 = vld.sshfl [vmem:[#allocation1 + $0x10] sm:$0xff pattern:$0x75316420]
      %985 = vrot.lane.b32.xlu0 %v982, 94
      %v986 = vpop.permute.xlu0 %985
      %987 = vrot.lane.b32.xlu0 %v983, 94
      %v988 = vpop.permute.xlu0 %987
      %989 = vrot.lane.b32.xlu0 %v984, 94
      %v990 = vpop.permute.xlu0 %989
      %v991 = vsel %vm588, %v986, %v988
      %v992 = vsel %vm588, %v988, %v990
      %995 = vst [vmem:[#allocation3 + $0x40] sm:$0xf] %v991
      %996 = vst [vmem:[#allocation3 + $0x48] sm:$0xf] %v992
      %v997 = vld [vmem:[#allocation3] sm:$0xff]
      %v998 = vld [vmem:[#allocation3 + $0x8] sm:$0xff]
      %v999 = vld [vmem:[#allocation3 + $0x10] sm:$0xff]
      %v1000 = vld [vmem:[#allocation3 + $0x18] sm:$0xff]
      %v1001 = vld [vmem:[#allocation3 + $0x20] sm:$0xff]
      %v1002 = vld [vmem:[#allocation3 + $0x28] sm:$0xff]
      %v1003 = vld [vmem:[#allocation3 + $0x30] sm:$0xff]
      %v1004 = vld [vmem:[#allocation3 + $0x38] sm:$0xff]
      %v1005 = vld [vmem:[#allocation3 + $0x40] sm:$0xf]
      %v1006 = vld [vmem:[#allocation3 + $0x48] sm:$0xf]
      %v1008 = vsel %vm345, %v1005, 0
      %v1011 = vsel %vm345, %v1006, 0
      %1013 = vmatpush.msra.mxu0 0.0
      %1014 = vmatpush.msra.mxu0 0.0
      %1015 = vmatpush.msra.mxu0 0.0
      %1016 = vmatpush.msra.mxu0 0.0
      %1017 = vmatpush.msra.mxu0 0.0
      %1018 = vmatpush.msra.mxu0 0.0
      %1019 = vmatpush.msra.mxu0 0.0
      %1020 = vmatpush.msra.mxu0 0.0
      %1021 = vmatpush.msra.mxu0 0.0
      %1022 = vmatpush.msra.mxu0 0.0
      %1023 = vmatpush.msra.mxu0 0.0
      %1024 = vmatpush.msra.mxu0 %v1008
      %1025 = vmatpush.msra.mxu0 %v1003
      %1026 = vmatpush.msra.mxu0 %v1001
      %1027 = vmatpush.msra.mxu0 %v999
      %1028 = vmatpush.msra.mxu0 %v997
      %1029 = vmatmul.f32.gmra.mxu0 %v617
      %v1030 = vpop.f32.mrf.mxu0
      %v1031 = vadd.f32 %v608, %v1030
      %1032 = vmatmul.f32.gmra.mxu0 %v620
      %v1033 = vpop.f32.mrf.mxu0
      %v1034 = vadd.f32 %v613, %v1033
      %1035 = vdwg.mxu0
      %1036 = vmatpush.msra.mxu0 0.0
      %1037 = vmatpush.msra.mxu0 0.0
      %1038 = vmatpush.msra.mxu0 0.0
      %1039 = vmatpush.msra.mxu0 0.0
      %1040 = vmatpush.msra.mxu0 0.0
      %1041 = vmatpush.msra.mxu0 0.0
      %1042 = vmatpush.msra.mxu0 0.0
      %1043 = vmatpush.msra.mxu0 0.0
      %1044 = vmatpush.msra.mxu0 0.0
      %1045 = vmatpush.msra.mxu0 0.0
      %1046 = vmatpush.msra.mxu0 0.0
      %1047 = vmatpush.msra.mxu0 %v1011
      %1048 = vmatpush.msra.mxu0 %v1004
      %1049 = vmatpush.msra.mxu0 %v1002
      %1050 = vmatpush.msra.mxu0 %v1000
      %1051 = vmatpush.msra.mxu0 %v998
      %1052 = vmatmul.f32.gmra.mxu0 %v617
      %v1053 = vpop.f32.mrf.mxu0
      %v1054 = vadd.f32 %v608, %v1053
      %1055 = vmatmul.f32.gmra.mxu0 %v620
      %v1056 = vpop.f32.mrf.mxu0
      %v1057 = vadd.f32 %v613, %v1056
      %1058 = vdwg.mxu0
      %p1059 = scmp.lt.s32.totalorder %s785, 0
      %s1060 = ssub.s32 0, %s785
      %s1061 = scalar_select %p1059, %s1060, %s785
      %s1062 = sdiv.u32.pop %s1061, 3
      %s1063 = srem.u32.pop %s1061, 3
      %s1064 = ssub.s32 0, %s1063
      %s1065 = scalar_select %p1059, %s1064, %s1063
      %p1066 = scmp.ne.s32.totalorder %s1065, 0
      %p1067 = scmp.lt.s32.totalorder %s1065, 0
      %p1068 = pnand %p1067, %p1066
      %p1069 = pneg %p1068
      %s1070 = sadd.s32 %s1065, 3
      %s1071 = scalar_select %p1069, %s1070, %s1065
      %s1072 = smul.u32 %s1071, 16
      %s1073 = sshra.s32 %s1072, 3
      %s1074 = sand.u32 %s1072, 7
      %s1075 = smul.u32 %s1073, 2
      %s1076 = smul.addr %s1075, 8
      %s1077 = scalar_lea.vmem [#allocation4], %s1076
      %1078 = vst [vmem:[%s1077] sm:$0xff] %v1031
      %1079 = vst [vmem:[%s1077 + $0x8] sm:$0xff] %v1054
      %1080 = vst [vmem:[%s1077 + $0x10] sm:$0xff] %v1034
      %1081 = vst [vmem:[%s1077 + $0x18] sm:$0xff] %v1057
      %p1082 = scmp.eq.s32.totalorder %s785, 0
      %p1083 = scmp.eq.s32.totalorder %s785, 1
      %s1084 = sadd.s32 %s1071, 2
      %s1085 = scalar_select %p1083, 1, %s1084
      %s1086 = scalar_select %p1082, 0, %s1085
      %s1087 = smul.u32 %s1086, 16
      %s1088 = scalar_lea.vmem %s3, %s1087
      %v1089 = vld [vmem:[%s1088] sm:$0xff]
      %v1090 = vld [vmem:[%s1088 + $0x8] sm:$0xff]
      %v1091 = vld [vmem:[#allocation4] sm:$0xff]
      %v1092 = vld [vmem:[#allocation4 + $0x8] sm:$0xff]
      %v1093 = vld [vmem:[#allocation4 + $0x10] sm:$0xff]
      %v1094 = vld [vmem:[#allocation4 + $0x18] sm:$0xff]
      %v1095 = vld [vmem:[#allocation4 + $0x20] sm:$0xff]
      %v1096 = vld [vmem:[#allocation4 + $0x28] sm:$0xff]
      %v1097 = vld [vmem:[#allocation4 + $0x30] sm:$0xff]
      %v1098 = vld [vmem:[#allocation4 + $0x38] sm:$0xff]
      %v1099 = vld [vmem:[#allocation4 + $0x40] sm:$0xff]
      %v1100 = vld [vmem:[#allocation4 + $0x48] sm:$0xff]
      %v1101 = vld [vmem:[#allocation4 + $0x50] sm:$0xff]
      %v1102 = vld [vmem:[#allocation4 + $0x58] sm:$0xff]
      %v1104 = vsel %vm728, %v1089, 0
      %v1107 = vsel %vm728, %v1090, 0
      %1109 = vmatpush.msra.mxu0 0.0
      %1110 = vmatpush.msra.mxu0 0.0
      %1111 = vmatpush.msra.mxu0 0.0
      %1112 = vmatpush.msra.mxu0 0.0
      %1113 = vmatpush.msra.mxu0 0.0
      %1114 = vmatpush.msra.mxu0 0.0
      %1115 = vmatpush.msra.mxu0 0.0
      %1116 = vmatpush.msra.mxu0 0.0
      %1117 = vmatpush.msra.mxu0 0.0
      %1118 = vmatpush.msra.mxu0 0.0
      %1119 = vmatpush.msra.mxu0 %v1101
      %1120 = vmatpush.msra.mxu0 %v1099
      %1121 = vmatpush.msra.mxu0 %v1097
      %1122 = vmatpush.msra.mxu0 %v1095
      %1123 = vmatpush.msra.mxu0 %v1093
      %1124 = vmatpush.msra.mxu0 %v1091
      %1125 = vmatmul.f32.gmra.mxu0 %v1104
      %v1126 = vpop.f32.mrf.mxu0
      %v1127 = vadd.f32 %v721, %v1126
      %1128 = vmatmul.f32.gmra.mxu0 %v1107
      %v1129 = vpop.f32.mrf.mxu0
      %v1130 = vadd.f32 %v726, %v1129
      %1131 = vdwg.mxu0
      %1132 = vmatpush.msra.mxu0 0.0
      %1133 = vmatpush.msra.mxu0 0.0
      %1134 = vmatpush.msra.mxu0 0.0
      %1135 = vmatpush.msra.mxu0 0.0
      %1136 = vmatpush.msra.mxu0 0.0
      %1137 = vmatpush.msra.mxu0 0.0
      %1138 = vmatpush.msra.mxu0 0.0
      %1139 = vmatpush.msra.mxu0 0.0
      %1140 = vmatpush.msra.mxu0 0.0
      %1141 = vmatpush.msra.mxu0 0.0
      %1142 = vmatpush.msra.mxu0 %v1102
      %1143 = vmatpush.msra.mxu0 %v1100
      %1144 = vmatpush.msra.mxu0 %v1098
      %1145 = vmatpush.msra.mxu0 %v1096
      %1146 = vmatpush.msra.mxu0 %v1094
      %1147 = vmatpush.msra.mxu0 %v1092
      %1148 = vmatmul.f32.gmra.mxu0 %v1104
      %v1149 = vpop.f32.mrf.mxu0
      %v1150 = vadd.f32 %v721, %v1149
      %1151 = vmatmul.f32.gmra.mxu0 %v1107
      %v1152 = vpop.f32.mrf.mxu0
      %v1153 = vadd.f32 %v726, %v1152
      %1154 = vdwg.mxu0
      %s1155 = scalar_lea.vmem %s294, 32
      %1156 = vst [vmem:[%s1155] sm:$0xff] %v1127
      %1157 = vst [vmem:[%s1155 + $0x8] sm:$0xff] %v1150
      %1158 = vst [vmem:[%s1155 + $0x10] sm:$0xff] %v1130
      %1159 = vst [vmem:[%s1155 + $0x18] sm:$0xff] %v1153
      %s1160 = sadd.s32 %s324, 2
      %s1161 = scalar_lea.vmem %s283, 16
      %v1162 = vld [vmem:[%s1161] sm:$0xff]
      %1164 = vrot.lane.b32.xlu0 %v1162, 17
      %v1165 = vpop.permute.xlu0 %1164
      %v1166 = vrot.slane %v1165, 4
      %v1167 = vsel %vm330, %v1166, %v1165
      %1170 = vst.msk [vmem:[#allocation2] sm:$0xff] %vm336, %v1167
      %1171 = vst.msk [vmem:[#allocation2 + $0x8] sm:$0xf] %vm338, %v1166
      %v1172 = vld [vmem:[#allocation2] sm:$0xff]
      %v1173 = vmul.f32 %v1172, %v346
      %1175 = vst [vmem:[#allocation1] ss:$2 sm:$0xff] %v1173
      %v1176 = vld.sshfl [vmem:[#allocation1] sm:$0xff pattern:$0x75316420]
      %v1177 = vld.sshfl [vmem:[#allocation1 + $0x8] sm:$0xff pattern:$0x75316420]
      %1180 = vst [vmem:[#allocation3] sm:$0xf] %v1176
      %1181 = vst [vmem:[#allocation3 + $0x8] sm:$0xf] %v1177
      %v1182 = vld [vmem:[#allocation2] sm:$0xff]
      %v1183 = vld [vmem:[#allocation2 + $0x8] sm:$0xf]
      %s1186 = scalar_lea.vmem [#allocation1], 1
      %1187 = vst [vmem:[%s1186] ss:$2 sm:$0xff] %v1182
      %s1188 = scalar_lea.vmem [#allocation1], 17
      %1189 = vst [vmem:[%s1188] ss:$2 sm:$0xff] %v1183
      %v1190 = vld.sshfl [vmem:[#allocation1] sm:$0xff pattern:$0x75316420]
      %v1191 = vld.sshfl [vmem:[#allocation1 + $0x8] sm:$0xff pattern:$0x75316420]
      %v1192 = vld.sshfl [vmem:[#allocation1 + $0x10] sm:$0xff pattern:$0x75316420]
      %1193 = vrot.lane.b32.xlu0 %v1190, 127
      %v1194 = vpop.permute.xlu0 %1193
      %1195 = vrot.lane.b32.xlu0 %v1191, 127
      %v1196 = vpop.permute.xlu0 %1195
      %1197 = vrot.lane.b32.xlu0 %v1192, 127
      %v1198 = vpop.permute.xlu0 %1197
      %v1199 = vsel %vm374, %v1194, %v1196
      %v1200 = vsel %vm374, %v1196, %v1198
      %1203 = vst [vmem:[#allocation3] sm:$0xf0] %v1199
      %1204 = vst [vmem:[#allocation3 + $0x8] sm:$0xf0] %v1200
      %v1205 = vld [vmem:[#allocation2] sm:$0xff]
      %v1206 = vld [vmem:[#allocation2 + $0x8] sm:$0xf]
      %v1207 = vmul.f32 %v1205, %v392
      %v1208 = vmul.f32 %v1206, %v390
      %1211 = vst [vmem:[#allocation1] ss:$2 sm:$0xff] %v1207
      %s1212 = scalar_lea.vmem [#allocation1], 16
      %1213 = vst [vmem:[%s1212] ss:$2 sm:$0xff] %v1208
      %v1214 = vld.sshfl [vmem:[#allocation1] sm:$0xff pattern:$0x75316420]
      %v1215 = vld.sshfl [vmem:[#allocation1 + $0x8] sm:$0xff pattern:$0x75316420]
      %v1216 = vld.sshfl [vmem:[#allocation1 + $0x10] sm:$0xff pattern:$0x75316420]
      %1217 = vrot.lane.b32.xlu0 %v1214, 126
      %v1218 = vpop.permute.xlu0 %1217
      %1219 = vrot.lane.b32.xlu0 %v1215, 126
      %v1220 = vpop.permute.xlu0 %1219
      %1221 = vrot.lane.b32.xlu0 %v1216, 126
      %v1222 = vpop.permute.xlu0 %1221
      %v1223 = vsel %vm411, %v1218, %v1220
      %v1224 = vsel %vm411, %v1220, %v1222
      %1227 = vst [vmem:[#allocation3 + $0x10] sm:$0xf] %v1223
      %1228 = vst [vmem:[#allocation3 + $0x18] sm:$0xf] %v1224
      %v1229 = vld [vmem:[#allocation2] sm:$0xff]
      %v1230 = vld [vmem:[#allocation2 + $0x8] sm:$0xf]
      %v1231 = vmul.f32 %v1229, %v424
      %v1232 = vmul.f32 %v1230, %v422
      %s1235 = scalar_lea.vmem [#allocation1], 1
      %1236 = vst [vmem:[%s1235] ss:$2 sm:$0xff] %v1231
      %s1237 = scalar_lea.vmem [#allocation1], 17
      %1238 = vst [vmem:[%s1237] ss:$2 sm:$0xff] %v1232
      %v1239 = vld.sshfl [vmem:[#allocation1] sm:$0xff pattern:$0x75316420]
      %v1240 = vld.sshfl [vmem:[#allocation1 + $0x8] sm:$0xff pattern:$0x75316420]
      %v1241 = vld.sshfl [vmem:[#allocation1 + $0x10] sm:$0xff pattern:$0x75316420]
      %1242 = vrot.lane.b32.xlu0 %v1239, 112
      %v1243 = vpop.permute.xlu0 %1242
      %1244 = vrot.lane.b32.xlu0 %v1240, 112
      %v1245 = vpop.permute.xlu0 %1244
      %1246 = vrot.lane.b32.xlu0 %v1241, 112
      %v1247 = vpop.permute.xlu0 %1246
      %v1248 = vsel %vm444, %v1243, %v1245
      %v1249 = vsel %vm444, %v1245, %v1247
      %1252 = vst [vmem:[#allocation3 + $0x10] sm:$0xf0] %v1248
      %1253 = vst [vmem:[#allocation3 + $0x18] sm:$0xf0] %v1249
      %v1254 = vld [vmem:[#allocation2] sm:$0xff]
      %v1255 = vld [vmem:[#allocation2 + $0x8] sm:$0xf]
      %1258 = vst [vmem:[#allocation1] ss:$2 sm:$0xff] %v1254
      %s1259 = scalar_lea.vmem [#allocation1], 16
      %1260 = vst [vmem:[%s1259] ss:$2 sm:$0xff] %v1255
      %v1261 = vld.sshfl [vmem:[#allocation1] sm:$0xff pattern:$0x75316420]
      %v1262 = vld.sshfl [vmem:[#allocation1 + $0x8] sm:$0xff pattern:$0x75316420]
      %v1263 = vld.sshfl [vmem:[#allocation1 + $0x10] sm:$0xff pattern:$0x75316420]
      %1264 = vrot.lane.b32.xlu0 %v1261, 111
      %v1265 = vpop.permute.xlu0 %1264
      %1266 = vrot.lane.b32.xlu0 %v1262, 111
      %v1267 = vpop.permute.xlu0 %1266
      %1268 = vrot.lane.b32.xlu0 %v1263, 111
      %v1269 = vpop.permute.xlu0 %1268
      %v1270 = vsel %vm467, %v1265, %v1267
      %v1271 = vsel %vm467, %v1267, %v1269
      %1274 = vst [vmem:[#allocation3 + $0x20] sm:$0xf] %v1270
      %1275 = vst [vmem:[#allocation3 + $0x28] sm:$0xf] %v1271
      %v1276 = vld [vmem:[#allocation2] sm:$0xff]
      %v1277 = vld [vmem:[#allocation2 + $0x8] sm:$0xf]
      %v1278 = vmul.f32 %v1276, %v480
      %v1279 = vmul.f32 %v1277, %v478
      %s1282 = scalar_lea.vmem [#allocation1], 1
      %1283 = vst [vmem:[%s1282] ss:$2 sm:$0xff] %v1278
      %s1284 = scalar_lea.vmem [#allocation1], 17
      %1285 = vst [vmem:[%s1284] ss:$2 sm:$0xff] %v1279
      %v1286 = vld.sshfl [vmem:[#allocation1] sm:$0xff pattern:$0x75316420]
      %v1287 = vld.sshfl [vmem:[#allocation1 + $0x8] sm:$0xff pattern:$0x75316420]
      %v1288 = vld.sshfl [vmem:[#allocation1 + $0x10] sm:$0xff pattern:$0x75316420]
      %1289 = vrot.lane.b32.xlu0 %v1286, 110
      %v1290 = vpop.permute.xlu0 %1289
      %1291 = vrot.lane.b32.xlu0 %v1287, 110
      %v1292 = vpop.permute.xlu0 %1291
      %1293 = vrot.lane.b32.xlu0 %v1288, 110
      %v1294 = vpop.permute.xlu0 %1293
      %v1295 = vsel %vm500, %v1290, %v1292
      %v1296 = vsel %vm500, %v1292, %v1294
      %1299 = vst [vmem:[#allocation3 + $0x20] sm:$0xf0] %v1295
      %1300 = vst [vmem:[#allocation3 + $0x28] sm:$0xf0] %v1296
      %v1301 = vld [vmem:[#allocation2] sm:$0xff]
      %v1302 = vld [vmem:[#allocation2 + $0x8] sm:$0xf]
      %v1303 = vmul.f32 %v1301, %v513
      %v1304 = vmul.f32 %v1302, %v511
      %1307 = vst [vmem:[#allocation1] ss:$2 sm:$0xff] %v1303
      %s1308 = scalar_lea.vmem [#allocation1], 16
      %1309 = vst [vmem:[%s1308] ss:$2 sm:$0xff] %v1304
      %v1310 = vld.sshfl [vmem:[#allocation1] sm:$0xff pattern:$0x75316420]
      %v1311 = vld.sshfl [vmem:[#allocation1 + $0x8] sm:$0xff pattern:$0x75316420]
      %v1312 = vld.sshfl [vmem:[#allocation1 + $0x10] sm:$0xff pattern:$0x75316420]
      %1313 = vrot.lane.b32.xlu0 %v1310, 96
      %v1314 = vpop.permute.xlu0 %1313
      %1315 = vrot.lane.b32.xlu0 %v1311, 96
      %v1316 = vpop.permute.xlu0 %1315
      %1317 = vrot.lane.b32.xlu0 %v1312, 96
      %v1318 = vpop.permute.xlu0 %1317
      %v1319 = vsel %vm532, %v1314, %v1316
      %v1320 = vsel %vm532, %v1316, %v1318
      %1323 = vst [vmem:[#allocation3 + $0x30] sm:$0xf] %v1319
      %1324 = vst [vmem:[#allocation3 + $0x38] sm:$0xf] %v1320
      %v1325 = vld [vmem:[#allocation2] sm:$0xff]
      %v1326 = vld [vmem:[#allocation2 + $0x8] sm:$0xf]
      %s1329 = scalar_lea.vmem [#allocation1], 1
      %1330 = vst [vmem:[%s1329] ss:$2 sm:$0xff] %v1325
      %s1331 = scalar_lea.vmem [#allocation1], 17
      %1332 = vst [vmem:[%s1331] ss:$2 sm:$0xff] %v1326
      %v1333 = vld.sshfl [vmem:[#allocation1] sm:$0xff pattern:$0x75316420]
      %v1334 = vld.sshfl [vmem:[#allocation1 + $0x8] sm:$0xff pattern:$0x75316420]
      %v1335 = vld.sshfl [vmem:[#allocation1 + $0x10] sm:$0xff pattern:$0x75316420]
      %1336 = vrot.lane.b32.xlu0 %v1333, 95
      %v1337 = vpop.permute.xlu0 %1336
      %1338 = vrot.lane.b32.xlu0 %v1334, 95
      %v1339 = vpop.permute.xlu0 %1338
      %1340 = vrot.lane.b32.xlu0 %v1335, 95
      %v1341 = vpop.permute.xlu0 %1340
      %v1342 = vsel %vm556, %v1337, %v1339
      %v1343 = vsel %vm556, %v1339, %v1341
      %1346 = vst [vmem:[#allocation3 + $0x30] sm:$0xf0] %v1342
      %1347 = vst [vmem:[#allocation3 + $0x38] sm:$0xf0] %v1343
      %v1348 = vld [vmem:[#allocation2] sm:$0xff]
      %v1349 = vld [vmem:[#allocation2 + $0x8] sm:$0xf]
      %v1350 = vmul.f32 %v1348, %v569
      %v1351 = vmul.f32 %v1349, %v567
      %1354 = vst [vmem:[#allocation1] ss:$2 sm:$0xff] %v1350
      %s1355 = scalar_lea.vmem [#allocation1], 16
      %1356 = vst [vmem:[%s1355] ss:$2 sm:$0xff] %v1351
      %v1357 = vld.sshfl [vmem:[#allocation1] sm:$0xff pattern:$0x75316420]
      %v1358 = vld.sshfl [vmem:[#allocation1 + $0x8] sm:$0xff pattern:$0x75316420]
      %v1359 = vld.sshfl [vmem:[#allocation1 + $0x10] sm:$0xff pattern:$0x75316420]
      %1360 = vrot.lane.b32.xlu0 %v1357, 94
      %v1361 = vpop.permute.xlu0 %1360
      %1362 = vrot.lane.b32.xlu0 %v1358, 94
      %v1363 = vpop.permute.xlu0 %1362
      %1364 = vrot.lane.b32.xlu0 %v1359, 94
      %v1365 = vpop.permute.xlu0 %1364
      %v1366 = vsel %vm588, %v1361, %v1363
      %v1367 = vsel %vm588, %v1363, %v1365
      %1370 = vst [vmem:[#allocation3 + $0x40] sm:$0xf] %v1366
      %1371 = vst [vmem:[#allocation3 + $0x48] sm:$0xf] %v1367
      %v1372 = vld [vmem:[#allocation3] sm:$0xff]
      %v1373 = vld [vmem:[#allocation3 + $0x8] sm:$0xff]
      %v1374 = vld [vmem:[#allocation3 + $0x10] sm:$0xff]
      %v1375 = vld [vmem:[#allocation3 + $0x18] sm:$0xff]
      %v1376 = vld [vmem:[#allocation3 + $0x20] sm:$0xff]
      %v1377 = vld [vmem:[#allocation3 + $0x28] sm:$0xff]
      %v1378 = vld [vmem:[#allocation3 + $0x30] sm:$0xff]
      %v1379 = vld [vmem:[#allocation3 + $0x38] sm:$0xff]
      %v1380 = vld [vmem:[#allocation3 + $0x40] sm:$0xf]
      %v1381 = vld [vmem:[#allocation3 + $0x48] sm:$0xf]
      %v1383 = vsel %vm345, %v1380, 0
      %v1386 = vsel %vm345, %v1381, 0
      %1388 = vmatpush.msra.mxu0 0.0
      %1389 = vmatpush.msra.mxu0 0.0
      %1390 = vmatpush.msra.mxu0 0.0
      %1391 = vmatpush.msra.mxu0 0.0
      %1392 = vmatpush.msra.mxu0 0.0
      %1393 = vmatpush.msra.mxu0 0.0
      %1394 = vmatpush.msra.mxu0 0.0
      %1395 = vmatpush.msra.mxu0 0.0
      %1396 = vmatpush.msra.mxu0 0.0
      %1397 = vmatpush.msra.mxu0 0.0
      %1398 = vmatpush.msra.mxu0 0.0
      %1399 = vmatpush.msra.mxu0 %v1383
      %1400 = vmatpush.msra.mxu0 %v1378
      %1401 = vmatpush.msra.mxu0 %v1376
      %1402 = vmatpush.msra.mxu0 %v1374
      %1403 = vmatpush.msra.mxu0 %v1372
      %1404 = vmatmul.f32.gmra.mxu0 %v617
      %v1405 = vpop.f32.mrf.mxu0
      %v1406 = vadd.f32 %v608, %v1405
      %1407 = vmatmul.f32.gmra.mxu0 %v620
      %v1408 = vpop.f32.mrf.mxu0
      %v1409 = vadd.f32 %v613, %v1408
      %1410 = vdwg.mxu0
      %1411 = vmatpush.msra.mxu0 0.0
      %1412 = vmatpush.msra.mxu0 0.0
      %1413 = vmatpush.msra.mxu0 0.0
      %1414 = vmatpush.msra.mxu0 0.0
      %1415 = vmatpush.msra.mxu0 0.0
      %1416 = vmatpush.msra.mxu0 0.0
      %1417 = vmatpush.msra.mxu0 0.0
      %1418 = vmatpush.msra.mxu0 0.0
      %1419 = vmatpush.msra.mxu0 0.0
      %1420 = vmatpush.msra.mxu0 0.0
      %1421 = vmatpush.msra.mxu0 0.0
      %1422 = vmatpush.msra.mxu0 %v1386
      %1423 = vmatpush.msra.mxu0 %v1379
      %1424 = vmatpush.msra.mxu0 %v1377
      %1425 = vmatpush.msra.mxu0 %v1375
      %1426 = vmatpush.msra.mxu0 %v1373
      %1427 = vmatmul.f32.gmra.mxu0 %v617
      %v1428 = vpop.f32.mrf.mxu0
      %v1429 = vadd.f32 %v608, %v1428
      %1430 = vmatmul.f32.gmra.mxu0 %v620
      %v1431 = vpop.f32.mrf.mxu0
      %v1432 = vadd.f32 %v613, %v1431
      %1433 = vdwg.mxu0
      %p1434 = scmp.lt.s32.totalorder %s1160, 0
      %s1435 = ssub.s32 0, %s1160
      %s1436 = scalar_select %p1434, %s1435, %s1160
      %s1437 = sdiv.u32.pop %s1436, 3
      %s1438 = srem.u32.pop %s1436, 3
      %s1439 = ssub.s32 0, %s1438
      %s1440 = scalar_select %p1434, %s1439, %s1438
      %p1441 = scmp.ne.s32.totalorder %s1440, 0
      %p1442 = scmp.lt.s32.totalorder %s1440, 0
      %p1443 = pnand %p1442, %p1441
      %p1444 = pneg %p1443
      %s1445 = sadd.s32 %s1440, 3
      %s1446 = scalar_select %p1444, %s1445, %s1440
      %s1447 = smul.u32 %s1446, 16
      %s1448 = sshra.s32 %s1447, 3
      %s1449 = sand.u32 %s1447, 7
      %s1450 = smul.u32 %s1448, 2
      %s1451 = smul.addr %s1450, 8
      %s1452 = scalar_lea.vmem [#allocation4], %s1451
      %1453 = vst [vmem:[%s1452] sm:$0xff] %v1406
      %1454 = vst [vmem:[%s1452 + $0x8] sm:$0xff] %v1429
      %1455 = vst [vmem:[%s1452 + $0x10] sm:$0xff] %v1409
      %1456 = vst [vmem:[%s1452 + $0x18] sm:$0xff] %v1432
      %p1457 = scmp.eq.s32.totalorder %s1160, 0
      %p1458 = scmp.eq.s32.totalorder %s1160, 1
      %s1459 = sadd.s32 %s1446, 2
      %s1460 = scalar_select %p1458, 1, %s1459
      %s1461 = scalar_select %p1457, 0, %s1460
      %s1462 = smul.u32 %s1461, 16
      %s1463 = scalar_lea.vmem %s3, %s1462
      %v1464 = vld [vmem:[%s1463] sm:$0xff]
      %v1465 = vld [vmem:[%s1463 + $0x8] sm:$0xff]
      %v1466 = vld [vmem:[#allocation4] sm:$0xff]
      %v1467 = vld [vmem:[#allocation4 + $0x8] sm:$0xff]
      %v1468 = vld [vmem:[#allocation4 + $0x10] sm:$0xff]
      %v1469 = vld [vmem:[#allocation4 + $0x18] sm:$0xff]
      %v1470 = vld [vmem:[#allocation4 + $0x20] sm:$0xff]
      %v1471 = vld [vmem:[#allocation4 + $0x28] sm:$0xff]
      %v1472 = vld [vmem:[#allocation4 + $0x30] sm:$0xff]
      %v1473 = vld [vmem:[#allocation4 + $0x38] sm:$0xff]
      %v1474 = vld [vmem:[#allocation4 + $0x40] sm:$0xff]
      %v1475 = vld [vmem:[#allocation4 + $0x48] sm:$0xff]
      %v1476 = vld [vmem:[#allocation4 + $0x50] sm:$0xff]
      %v1477 = vld [vmem:[#allocation4 + $0x58] sm:$0xff]
      %v1479 = vsel %vm728, %v1464, 0
      %v1482 = vsel %vm728, %v1465, 0
      %1484 = vmatpush.msra.mxu0 0.0
      %1485 = vmatpush.msra.mxu0 0.0
      %1486 = vmatpush.msra.mxu0 0.0
      %1487 = vmatpush.msra.mxu0 0.0
      %1488 = vmatpush.msra.mxu0 0.0
      %1489 = vmatpush.msra.mxu0 0.0
      %1490 = vmatpush.msra.mxu0 0.0
      %1491 = vmatpush.msra.mxu0 0.0
      %1492 = vmatpush.msra.mxu0 0.0
      %1493 = vmatpush.msra.mxu0 0.0
      %1494 = vmatpush.msra.mxu0 %v1476
      %1495 = vmatpush.msra.mxu0 %v1474
      %1496 = vmatpush.msra.mxu0 %v1472
      %1497 = vmatpush.msra.mxu0 %v1470
      %1498 = vmatpush.msra.mxu0 %v1468
      %1499 = vmatpush.msra.mxu0 %v1466
      %1500 = vmatmul.f32.gmra.mxu0 %v1479
      %v1501 = vpop.f32.mrf.mxu0
      %v1502 = vadd.f32 %v721, %v1501
      %1503 = vmatmul.f32.gmra.mxu0 %v1482
      %v1504 = vpop.f32.mrf.mxu0
      %v1505 = vadd.f32 %v726, %v1504
      %1506 = vdwg.mxu0
      %1507 = vmatpush.msra.mxu0 0.0
      %1508 = vmatpush.msra.mxu0 0.0
      %1509 = vmatpush.msra.mxu0 0.0
      %1510 = vmatpush.msra.mxu0 0.0
      %1511 = vmatpush.msra.mxu0 0.0
      %1512 = vmatpush.msra.mxu0 0.0
      %1513 = vmatpush.msra.mxu0 0.0
      %1514 = vmatpush.msra.mxu0 0.0
      %1515 = vmatpush.msra.mxu0 0.0
      %1516 = vmatpush.msra.mxu0 0.0
      %1517 = vmatpush.msra.mxu0 %v1477
      %1518 = vmatpush.msra.mxu0 %v1475
      %1519 = vmatpush.msra.mxu0 %v1473
      %1520 = vmatpush.msra.mxu0 %v1471
      %1521 = vmatpush.msra.mxu0 %v1469
      %1522 = vmatpush.msra.mxu0 %v1467
      %1523 = vmatmul.f32.gmra.mxu0 %v1479
      %v1524 = vpop.f32.mrf.mxu0
      %v1525 = vadd.f32 %v721, %v1524
      %1526 = vmatmul.f32.gmra.mxu0 %v1482
      %v1527 = vpop.f32.mrf.mxu0
      %v1528 = vadd.f32 %v726, %v1527
      %1529 = vdwg.mxu0
      %s1530 = scalar_lea.vmem %s294, 64
      %1531 = vst [vmem:[%s1530] sm:$0xff] %v1502
      %1532 = vst [vmem:[%s1530 + $0x8] sm:$0xff] %v1525
      %1533 = vst [vmem:[%s1530 + $0x10] sm:$0xff] %v1505
      %1534 = vst [vmem:[%s1530 + $0x18] sm:$0xff] %v1528
      %s1535 = sadd.s32 %s324, 3
      %s1536 = scalar_lea.vmem %s283, 24
      %v1537 = vld [vmem:[%s1536] sm:$0xff]
      %1539 = vrot.lane.b32.xlu0 %v1537, 17
      %v1540 = vpop.permute.xlu0 %1539
      %v1541 = vrot.slane %v1540, 4
      %v1542 = vsel %vm330, %v1541, %v1540
      %1545 = vst.msk [vmem:[#allocation2] sm:$0xff] %vm336, %v1542
      %1546 = vst.msk [vmem:[#allocation2 + $0x8] sm:$0xf] %vm338, %v1541
      %v1547 = vld [vmem:[#allocation2] sm:$0xff]
      %v1548 = vmul.f32 %v1547, %v346
      %1550 = vst [vmem:[#allocation1] ss:$2 sm:$0xff] %v1548
      %v1551 = vld.sshfl [vmem:[#allocation1] sm:$0xff pattern:$0x75316420]
      %v1552 = vld.sshfl [vmem:[#allocation1 + $0x8] sm:$0xff pattern:$0x75316420]
      %1555 = vst [vmem:[#allocation3] sm:$0xf] %v1551
      %1556 = vst [vmem:[#allocation3 + $0x8] sm:$0xf] %v1552
      %v1557 = vld [vmem:[#allocation2] sm:$0xff]
      %v1558 = vld [vmem:[#allocation2 + $0x8] sm:$0xf]
      %s1561 = scalar_lea.vmem [#allocation1], 1
      %1562 = vst [vmem:[%s1561] ss:$2 sm:$0xff] %v1557
      %s1563 = scalar_lea.vmem [#allocation1], 17
      %1564 = vst [vmem:[%s1563] ss:$2 sm:$0xff] %v1558
      %v1565 = vld.sshfl [vmem:[#allocation1] sm:$0xff pattern:$0x75316420]
      %v1566 = vld.sshfl [vmem:[#allocation1 + $0x8] sm:$0xff pattern:$0x75316420]
      %v1567 = vld.sshfl [vmem:[#allocation1 + $0x10] sm:$0xff pattern:$0x75316420]
      %1568 = vrot.lane.b32.xlu0 %v1565, 127
      %v1569 = vpop.permute.xlu0 %1568
      %1570 = vrot.lane.b32.xlu0 %v1566, 127
      %v1571 = vpop.permute.xlu0 %1570
      %1572 = vrot.lane.b32.xlu0 %v1567, 127
      %v1573 = vpop.permute.xlu0 %1572
      %v1574 = vsel %vm374, %v1569, %v1571
      %v1575 = vsel %vm374, %v1571, %v1573
      %1578 = vst [vmem:[#allocation3] sm:$0xf0] %v1574
      %1579 = vst [vmem:[#allocation3 + $0x8] sm:$0xf0] %v1575
      %v1580 = vld [vmem:[#allocation2] sm:$0xff]
      %v1581 = vld [vmem:[#allocation2 + $0x8] sm:$0xf]
      %v1582 = vmul.f32 %v1580, %v392
      %v1583 = vmul.f32 %v1581, %v390
      %1586 = vst [vmem:[#allocation1] ss:$2 sm:$0xff] %v1582
      %s1587 = scalar_lea.vmem [#allocation1], 16
      %1588 = vst [vmem:[%s1587] ss:$2 sm:$0xff] %v1583
      %v1589 = vld.sshfl [vmem:[#allocation1] sm:$0xff pattern:$0x75316420]
      %v1590 = vld.sshfl [vmem:[#allocation1 + $0x8] sm:$0xff pattern:$0x75316420]
      %v1591 = vld.sshfl [vmem:[#allocation1 + $0x10] sm:$0xff pattern:$0x75316420]
      %1592 = vrot.lane.b32.xlu0 %v1589, 126
      %v1593 = vpop.permute.xlu0 %1592
      %1594 = vrot.lane.b32.xlu0 %v1590, 126
      %v1595 = vpop.permute.xlu0 %1594
      %1596 = vrot.lane.b32.xlu0 %v1591, 126
      %v1597 = vpop.permute.xlu0 %1596
      %v1598 = vsel %vm411, %v1593, %v1595
      %v1599 = vsel %vm411, %v1595, %v1597
      %1602 = vst [vmem:[#allocation3 + $0x10] sm:$0xf] %v1598
      %1603 = vst [vmem:[#allocation3 + $0x18] sm:$0xf] %v1599
      %v1604 = vld [vmem:[#allocation2] sm:$0xff]
      %v1605 = vld [vmem:[#allocation2 + $0x8] sm:$0xf]
      %v1606 = vmul.f32 %v1604, %v424
      %v1607 = vmul.f32 %v1605, %v422
      %s1610 = scalar_lea.vmem [#allocation1], 1
      %1611 = vst [vmem:[%s1610] ss:$2 sm:$0xff] %v1606
      %s1612 = scalar_lea.vmem [#allocation1], 17
      %1613 = vst [vmem:[%s1612] ss:$2 sm:$0xff] %v1607
      %v1614 = vld.sshfl [vmem:[#allocation1] sm:$0xff pattern:$0x75316420]
      %v1615 = vld.sshfl [vmem:[#allocation1 + $0x8] sm:$0xff pattern:$0x75316420]
      %v1616 = vld.sshfl [vmem:[#allocation1 + $0x10] sm:$0xff pattern:$0x75316420]
      %1617 = vrot.lane.b32.xlu0 %v1614, 112
      %v1618 = vpop.permute.xlu0 %1617
      %1619 = vrot.lane.b32.xlu0 %v1615, 112
      %v1620 = vpop.permute.xlu0 %1619
      %1621 = vrot.lane.b32.xlu0 %v1616, 112
      %v1622 = vpop.permute.xlu0 %1621
      %v1623 = vsel %vm444, %v1618, %v1620
      %v1624 = vsel %vm444, %v1620, %v1622
      %1627 = vst [vmem:[#allocation3 + $0x10] sm:$0xf0] %v1623
      %1628 = vst [vmem:[#allocation3 + $0x18] sm:$0xf0] %v1624
      %v1629 = vld [vmem:[#allocation2] sm:$0xff]
      %v1630 = vld [vmem:[#allocation2 + $0x8] sm:$0xf]
      %1633 = vst [vmem:[#allocation1] ss:$2 sm:$0xff] %v1629
      %s1634 = scalar_lea.vmem [#allocation1], 16
      %1635 = vst [vmem:[%s1634] ss:$2 sm:$0xff] %v1630
      %v1636 = vld.sshfl [vmem:[#allocation1] sm:$0xff pattern:$0x75316420]
      %v1637 = vld.sshfl [vmem:[#allocation1 + $0x8] sm:$0xff pattern:$0x75316420]
      %v1638 = vld.sshfl [vmem:[#allocation1 + $0x10] sm:$0xff pattern:$0x75316420]
      %1639 = vrot.lane.b32.xlu0 %v1636, 111
      %v1640 = vpop.permute.xlu0 %1639
      %1641 = vrot.lane.b32.xlu0 %v1637, 111
      %v1642 = vpop.permute.xlu0 %1641
      %1643 = vrot.lane.b32.xlu0 %v1638, 111
      %v1644 = vpop.permute.xlu0 %1643
      %v1645 = vsel %vm467, %v1640, %v1642
      %v1646 = vsel %vm467, %v1642, %v1644
      %1649 = vst [vmem:[#allocation3 + $0x20] sm:$0xf] %v1645
      %1650 = vst [vmem:[#allocation3 + $0x28] sm:$0xf] %v1646
      %v1651 = vld [vmem:[#allocation2] sm:$0xff]
      %v1652 = vld [vmem:[#allocation2 + $0x8] sm:$0xf]
      %v1653 = vmul.f32 %v1651, %v480
      %v1654 = vmul.f32 %v1652, %v478
      %s1657 = scalar_lea.vmem [#allocation1], 1
      %1658 = vst [vmem:[%s1657] ss:$2 sm:$0xff] %v1653
      %s1659 = scalar_lea.vmem [#allocation1], 17
      %1660 = vst [vmem:[%s1659] ss:$2 sm:$0xff] %v1654
      %v1661 = vld.sshfl [vmem:[#allocation1] sm:$0xff pattern:$0x75316420]
      %v1662 = vld.sshfl [vmem:[#allocation1 + $0x8] sm:$0xff pattern:$0x75316420]
      %v1663 = vld.sshfl [vmem:[#allocation1 + $0x10] sm:$0xff pattern:$0x75316420]
      %1664 = vrot.lane.b32.xlu0 %v1661, 110
      %v1665 = vpop.permute.xlu0 %1664
      %1666 = vrot.lane.b32.xlu0 %v1662, 110
      %v1667 = vpop.permute.xlu0 %1666
      %1668 = vrot.lane.b32.xlu0 %v1663, 110
      %v1669 = vpop.permute.xlu0 %1668
      %v1670 = vsel %vm500, %v1665, %v1667
      %v1671 = vsel %vm500, %v1667, %v1669
      %1674 = vst [vmem:[#allocation3 + $0x20] sm:$0xf0] %v1670
      %1675 = vst [vmem:[#allocation3 + $0x28] sm:$0xf0] %v1671
      %v1676 = vld [vmem:[#allocation2] sm:$0xff]
      %v1677 = vld [vmem:[#allocation2 + $0x8] sm:$0xf]
      %v1678 = vmul.f32 %v1676, %v513
      %v1679 = vmul.f32 %v1677, %v511
      %1682 = vst [vmem:[#allocation1] ss:$2 sm:$0xff] %v1678
      %s1683 = scalar_lea.vmem [#allocation1], 16
      %1684 = vst [vmem:[%s1683] ss:$2 sm:$0xff] %v1679
      %v1685 = vld.sshfl [vmem:[#allocation1] sm:$0xff pattern:$0x75316420]
      %v1686 = vld.sshfl [vmem:[#allocation1 + $0x8] sm:$0xff pattern:$0x75316420]
      %v1687 = vld.sshfl [vmem:[#allocation1 + $0x10] sm:$0xff pattern:$0x75316420]
      %1688 = vrot.lane.b32.xlu0 %v1685, 96
      %v1689 = vpop.permute.xlu0 %1688
      %1690 = vrot.lane.b32.xlu0 %v1686, 96
      %v1691 = vpop.permute.xlu0 %1690
      %1692 = vrot.lane.b32.xlu0 %v1687, 96
      %v1693 = vpop.permute.xlu0 %1692
      %v1694 = vsel %vm532, %v1689, %v1691
      %v1695 = vsel %vm532, %v1691, %v1693
      %1698 = vst [vmem:[#allocation3 + $0x30] sm:$0xf] %v1694
      %1699 = vst [vmem:[#allocation3 + $0x38] sm:$0xf] %v1695
      %v1700 = vld [vmem:[#allocation2] sm:$0xff]
      %v1701 = vld [vmem:[#allocation2 + $0x8] sm:$0xf]
      %s1704 = scalar_lea.vmem [#allocation1], 1
      %1705 = vst [vmem:[%s1704] ss:$2 sm:$0xff] %v1700
      %s1706 = scalar_lea.vmem [#allocation1], 17
      %1707 = vst [vmem:[%s1706] ss:$2 sm:$0xff] %v1701
      %v1708 = vld.sshfl [vmem:[#allocation1] sm:$0xff pattern:$0x75316420]
      %v1709 = vld.sshfl [vmem:[#allocation1 + $0x8] sm:$0xff pattern:$0x75316420]
      %v1710 = vld.sshfl [vmem:[#allocation1 + $0x10] sm:$0xff pattern:$0x75316420]
      %1711 = vrot.lane.b32.xlu0 %v1708, 95
      %v1712 = vpop.permute.xlu0 %1711
      %1713 = vrot.lane.b32.xlu0 %v1709, 95
      %v1714 = vpop.permute.xlu0 %1713
      %1715 = vrot.lane.b32.xlu0 %v1710, 95
      %v1716 = vpop.permute.xlu0 %1715
      %v1717 = vsel %vm556, %v1712, %v1714
      %v1718 = vsel %vm556, %v1714, %v1716
      %1721 = vst [vmem:[#allocation3 + $0x30] sm:$0xf0] %v1717
      %1722 = vst [vmem:[#allocation3 + $0x38] sm:$0xf0] %v1718
      %v1723 = vld [vmem:[#allocation2] sm:$0xff]
      %v1724 = vld [vmem:[#allocation2 + $0x8] sm:$0xf]
      %v1725 = vmul.f32 %v1723, %v569
      %v1726 = vmul.f32 %v1724, %v567
      %1729 = vst [vmem:[#allocation1] ss:$2 sm:$0xff] %v1725
      %s1730 = scalar_lea.vmem [#allocation1], 16
      %1731 = vst [vmem:[%s1730] ss:$2 sm:$0xff] %v1726
      %v1732 = vld.sshfl [vmem:[#allocation1] sm:$0xff pattern:$0x75316420]
      %v1733 = vld.sshfl [vmem:[#allocation1 + $0x8] sm:$0xff pattern:$0x75316420]
      %v1734 = vld.sshfl [vmem:[#allocation1 + $0x10] sm:$0xff pattern:$0x75316420]
      %1735 = vrot.lane.b32.xlu0 %v1732, 94
      %v1736 = vpop.permute.xlu0 %1735
      %1737 = vrot.lane.b32.xlu0 %v1733, 94
      %v1738 = vpop.permute.xlu0 %1737
      %1739 = vrot.lane.b32.xlu0 %v1734, 94
      %v1740 = vpop.permute.xlu0 %1739
      %v1741 = vsel %vm588, %v1736, %v1738
      %v1742 = vsel %vm588, %v1738, %v1740
      %1745 = vst [vmem:[#allocation3 + $0x40] sm:$0xf] %v1741
      %1746 = vst [vmem:[#allocation3 + $0x48] sm:$0xf] %v1742
      %v1747 = vld [vmem:[#allocation3] sm:$0xff]
      %v1748 = vld [vmem:[#allocation3 + $0x8] sm:$0xff]
      %v1749 = vld [vmem:[#allocation3 + $0x10] sm:$0xff]
      %v1750 = vld [vmem:[#allocation3 + $0x18] sm:$0xff]
      %v1751 = vld [vmem:[#allocation3 + $0x20] sm:$0xff]
      %v1752 = vld [vmem:[#allocation3 + $0x28] sm:$0xff]
      %v1753 = vld [vmem:[#allocation3 + $0x30] sm:$0xff]
      %v1754 = vld [vmem:[#allocation3 + $0x38] sm:$0xff]
      %v1755 = vld [vmem:[#allocation3 + $0x40] sm:$0xf]
      %v1756 = vld [vmem:[#allocation3 + $0x48] sm:$0xf]
      %v1758 = vsel %vm345, %v1755, 0
      %v1761 = vsel %vm345, %v1756, 0
      %1763 = vmatpush.msra.mxu0 0.0
      %1764 = vmatpush.msra.mxu0 0.0
      %1765 = vmatpush.msra.mxu0 0.0
      %1766 = vmatpush.msra.mxu0 0.0
      %1767 = vmatpush.msra.mxu0 0.0
      %1768 = vmatpush.msra.mxu0 0.0
      %1769 = vmatpush.msra.mxu0 0.0
      %1770 = vmatpush.msra.mxu0 0.0
      %1771 = vmatpush.msra.mxu0 0.0
      %1772 = vmatpush.msra.mxu0 0.0
      %1773 = vmatpush.msra.mxu0 0.0
      %1774 = vmatpush.msra.mxu0 %v1758
      %1775 = vmatpush.msra.mxu0 %v1753
      %1776 = vmatpush.msra.mxu0 %v1751
      %1777 = vmatpush.msra.mxu0 %v1749
      %1778 = vmatpush.msra.mxu0 %v1747
      %1779 = vmatmul.f32.gmra.mxu0 %v617
      %v1780 = vpop.f32.mrf.mxu0
      %v1781 = vadd.f32 %v608, %v1780
      %1782 = vmatmul.f32.gmra.mxu0 %v620
      %v1783 = vpop.f32.mrf.mxu0
      %v1784 = vadd.f32 %v613, %v1783
      %1785 = vdwg.mxu0
      %1786 = vmatpush.msra.mxu0 0.0
      %1787 = vmatpush.msra.mxu0 0.0
      %1788 = vmatpush.msra.mxu0 0.0
      %1789 = vmatpush.msra.mxu0 0.0
      %1790 = vmatpush.msra.mxu0 0.0
      %1791 = vmatpush.msra.mxu0 0.0
      %1792 = vmatpush.msra.mxu0 0.0
      %1793 = vmatpush.msra.mxu0 0.0
      %1794 = vmatpush.msra.mxu0 0.0
      %1795 = vmatpush.msra.mxu0 0.0
      %1796 = vmatpush.msra.mxu0 0.0
      %1797 = vmatpush.msra.mxu0 %v1761
      %1798 = vmatpush.msra.mxu0 %v1754
      %1799 = vmatpush.msra.mxu0 %v1752
      %1800 = vmatpush.msra.mxu0 %v1750
      %1801 = vmatpush.msra.mxu0 %v1748
      %1802 = vmatmul.f32.gmra.mxu0 %v617
      %v1803 = vpop.f32.mrf.mxu0
      %v1804 = vadd.f32 %v608, %v1803
      %1805 = vmatmul.f32.gmra.mxu0 %v620
      %v1806 = vpop.f32.mrf.mxu0
      %v1807 = vadd.f32 %v613, %v1806
      %1808 = vdwg.mxu0
      %p1809 = scmp.lt.s32.totalorder %s1535, 0
      %s1810 = ssub.s32 0, %s1535
      %s1811 = scalar_select %p1809, %s1810, %s1535
      %s1812 = sdiv.u32.pop %s1811, 3
      %s1813 = srem.u32.pop %s1811, 3
      %s1814 = ssub.s32 0, %s1813
      %s1815 = scalar_select %p1809, %s1814, %s1813
      %p1816 = scmp.ne.s32.totalorder %s1815, 0
      %p1817 = scmp.lt.s32.totalorder %s1815, 0
      %p1818 = pnand %p1817, %p1816
      %p1819 = pneg %p1818
      %s1820 = sadd.s32 %s1815, 3
      %s1821 = scalar_select %p1819, %s1820, %s1815
      %s1822 = smul.u32 %s1821, 16
      %s1823 = sshra.s32 %s1822, 3
      %s1824 = sand.u32 %s1822, 7
      %s1825 = smul.u32 %s1823, 2
      %s1826 = smul.addr %s1825, 8
      %s1827 = scalar_lea.vmem [#allocation4], %s1826
      %1828 = vst [vmem:[%s1827] sm:$0xff] %v1781
      %1829 = vst [vmem:[%s1827 + $0x8] sm:$0xff] %v1804
      %1830 = vst [vmem:[%s1827 + $0x10] sm:$0xff] %v1784
      %1831 = vst [vmem:[%s1827 + $0x18] sm:$0xff] %v1807
      %p1832 = scmp.eq.s32.totalorder %s1535, 0
      %p1833 = scmp.eq.s32.totalorder %s1535, 1
      %s1834 = sadd.s32 %s1821, 2
      %s1835 = scalar_select %p1833, 1, %s1834
      %s1836 = scalar_select %p1832, 0, %s1835
      %s1837 = smul.u32 %s1836, 16
      %s1838 = scalar_lea.vmem %s3, %s1837
      %v1839 = vld [vmem:[%s1838] sm:$0xff]
      %v1840 = vld [vmem:[%s1838 + $0x8] sm:$0xff]
      %v1841 = vld [vmem:[#allocation4] sm:$0xff]
      %v1842 = vld [vmem:[#allocation4 + $0x8] sm:$0xff]
      %v1843 = vld [vmem:[#allocation4 + $0x10] sm:$0xff]
      %v1844 = vld [vmem:[#allocation4 + $0x18] sm:$0xff]
      %v1845 = vld [vmem:[#allocation4 + $0x20] sm:$0xff]
      %v1846 = vld [vmem:[#allocation4 + $0x28] sm:$0xff]
      %v1847 = vld [vmem:[#allocation4 + $0x30] sm:$0xff]
      %v1848 = vld [vmem:[#allocation4 + $0x38] sm:$0xff]
      %v1849 = vld [vmem:[#allocation4 + $0x40] sm:$0xff]
      %v1850 = vld [vmem:[#allocation4 + $0x48] sm:$0xff]
      %v1851 = vld [vmem:[#allocation4 + $0x50] sm:$0xff]
      %v1852 = vld [vmem:[#allocation4 + $0x58] sm:$0xff]
      %v1854 = vsel %vm728, %v1839, 0
      %v1857 = vsel %vm728, %v1840, 0
      %1859 = vmatpush.msra.mxu0 0.0
      %1860 = vmatpush.msra.mxu0 0.0
      %1861 = vmatpush.msra.mxu0 0.0
      %1862 = vmatpush.msra.mxu0 0.0
      %1863 = vmatpush.msra.mxu0 0.0
      %1864 = vmatpush.msra.mxu0 0.0
      %1865 = vmatpush.msra.mxu0 0.0
      %1866 = vmatpush.msra.mxu0 0.0
      %1867 = vmatpush.msra.mxu0 0.0
      %1868 = vmatpush.msra.mxu0 0.0
      %1869 = vmatpush.msra.mxu0 %v1851
      %1870 = vmatpush.msra.mxu0 %v1849
      %1871 = vmatpush.msra.mxu0 %v1847
      %1872 = vmatpush.msra.mxu0 %v1845
      %1873 = vmatpush.msra.mxu0 %v1843
      %1874 = vmatpush.msra.mxu0 %v1841
      %1875 = vmatmul.f32.gmra.mxu0 %v1854
      %v1876 = vpop.f32.mrf.mxu0
      %v1877 = vadd.f32 %v721, %v1876
      %1878 = vmatmul.f32.gmra.mxu0 %v1857
      %v1879 = vpop.f32.mrf.mxu0
      %v1880 = vadd.f32 %v726, %v1879
      %1881 = vdwg.mxu0
      %1882 = vmatpush.msra.mxu0 0.0
      %1883 = vmatpush.msra.mxu0 0.0
      %1884 = vmatpush.msra.mxu0 0.0
      %1885 = vmatpush.msra.mxu0 0.0
      %1886 = vmatpush.msra.mxu0 0.0
      %1887 = vmatpush.msra.mxu0 0.0
      %1888 = vmatpush.msra.mxu0 0.0
      %1889 = vmatpush.msra.mxu0 0.0
      %1890 = vmatpush.msra.mxu0 0.0
      %1891 = vmatpush.msra.mxu0 0.0
      %1892 = vmatpush.msra.mxu0 %v1852
      %1893 = vmatpush.msra.mxu0 %v1850
      %1894 = vmatpush.msra.mxu0 %v1848
      %1895 = vmatpush.msra.mxu0 %v1846
      %1896 = vmatpush.msra.mxu0 %v1844
      %1897 = vmatpush.msra.mxu0 %v1842
      %1898 = vmatmul.f32.gmra.mxu0 %v1854
      %v1899 = vpop.f32.mrf.mxu0
      %v1900 = vadd.f32 %v721, %v1899
      %1901 = vmatmul.f32.gmra.mxu0 %v1857
      %v1902 = vpop.f32.mrf.mxu0
      %v1903 = vadd.f32 %v726, %v1902
      %1904 = vdwg.mxu0
      %s1905 = scalar_lea.vmem %s294, 96
      %1906 = vst [vmem:[%s1905] sm:$0xff] %v1877
      %1907 = vst [vmem:[%s1905 + $0x8] sm:$0xff] %v1900
      %1908 = vst [vmem:[%s1905 + $0x10] sm:$0xff] %v1880
      %1909 = vst [vmem:[%s1905 + $0x18] sm:$0xff] %v1903
      %s1910 = smul.u32 4, %s22
      %p1911 = scmp.lt.s32.totalorder %s21, 1
      %s1912 = scalar_select %p1911, %s21, 1
      %p1913 = scmp.lt.s32.totalorder %s1910, 7
      %s1914 = scalar_select %p1913, %s1910, 7
      %s1915 = smul.addr %s1914, 4
      %s1916 = smul.addr %s1912, 32
      %s1917 = sadd.s32 %s1915, %s1916
      %s1918 = smul.addr %s1917, 8
      %s1919 = scalar_lea.vmem %s6, %s1918
      // Predicated region
      $region49: #{cosmos_conv_projection_3d.1} parent=43 // pred_check
        %p1920 = pneg %p182
      $region50: #{cosmos_conv_projection_3d.1} parent=43 // pred_check_branch
        %1922 = sbr.rel (%p1920) target = $region52
      $region51: #{cosmos_conv_projection_3d.1} parent=43 // pred_region
        %s1923 = smul.u32 4, %s22
      $region52: #{cosmos_conv_projection_3d.1} parent=43 // pred_fallthru
        _
    $region44: #{cosmos_conv_projection_3d.1} parent=5 // pred_fallthru
      _
    %p1924 = scmp.le.s32.totalorder 2, %s12
    // Predicated region
    $region53: #{cosmos_conv_projection_3d.1} parent=5 // pred_check
      %p1925 = pneg %p1924
    $region54: #{cosmos_conv_projection_3d.1} parent=5 // pred_check_branch
      %1927 = sbr.rel (%p1925) target = $region56
    $region55: #{cosmos_conv_projection_3d.1} parent=5 // pred_region
      %s1928 = ssub.s32 %s12, 2
      // Predicated region
      $region57: #{cosmos_conv_projection_3d.1} parent=55 // pred_check
        %p1929 = pneg %p188
      $region58: #{cosmos_conv_projection_3d.1} parent=55 // pred_check_branch
        %1931 = sbr.rel (%p1929) target = $region60
      $region59: #{cosmos_conv_projection_3d.1} parent=55 // pred_region
        %s1932 = smul.u32 4, %s24
        %p1933 = scmp.lt.s32.totalorder %s23, 1
        %s1934 = scalar_select %p1933, %s23, 1
        %p1935 = scmp.lt.s32.totalorder %s1932, 7
        %s1936 = scalar_select %p1935, %s1932, 7
        %s1937 = smul.addr %s1936, 4
        %s1938 = smul.addr %s1934, 32
        %s1939 = sadd.s32 %s1937, %s1938
        %s1940 = smul.addr %s1939, 8
        %s1941 = scalar_lea.vmem %s6, %s1940
      $region60: #{cosmos_conv_projection_3d.1} parent=55 // pred_fallthru
        _
    $region56: #{cosmos_conv_projection_3d.1} parent=5 // pred_fallthru
      _
  $region6: #{cosmos_conv_projection_3d.1} parent=0 // loop_footer
    %s16 = sadd.s32 1, %s12
  $region7: #{cosmos_conv_projection_3d.1} parent=0 // loop_footer_branch
    %11 = sbr.rel target = $region3
  $region8: #{cosmos_conv_projection_3d.1} parent=0 // loop_exit
    _

</llo_original>
